<compile_context>
chip_gen: v7x
topology: tpu7x:2x2x1
jax: 0.10.0
libtpu: 0.0.40
codegen_flags: <defaults>
</compile_context>

<pallas_src>
import functools

import numpy as np
import jax
import jax.numpy as jnp
from jax import lax
from jax.experimental import pallas as pl
from jax.experimental.pallas import tpu as pltpu


def _sigmoid(z):
    return 1.0 / (1.0 + jnp.exp(-z))


# ----------------------------------------------------------------------------
# Fused CBAM kernel: one grid step processes a (Bt, C, S) slab.
# ----------------------------------------------------------------------------
def cbam_fused_kernel(wsp_ref, w1_ref, w2_ref, mask_ref, x_ref, o_ref,
                      pad_a_ref, pad_m_ref, *, H, W, ksize):
    K = ksize
    P = K // 2
    S = H * W
    MAXOFF = P * W + P                                      # max |dh*W + dw|

    xb = x_ref[...].astype(jnp.float32)                     # (Bt, C, S)

    # ---- channel attention: pool over S, 2-layer shared-weight MLP (VPU) ----
    avg = jnp.mean(xb, axis=2, keepdims=True)               # (Bt, C, 1)
    mx = jnp.max(xb, axis=2, keepdims=True)                 # (Bt, C, 1)
    w1 = w1_ref[...].astype(jnp.float32)                    # (Cr, C, 1)
    w2 = w2_ref[...].astype(jnp.float32)                    # (C, Cr, 1)
    # fc1 (1x1 conv) as broadcast-multiply + sublane reduce; ReLU; shared
    # weights for the avg/max branches, fc2 applied once to the sum.
    h_avg = jnp.sum(avg[:, None] * w1[None], axis=2)        # (Bt, Cr, 1)
    h_max = jnp.sum(mx[:, None] * w1[None], axis=2)         # (Bt, Cr, 1)
    h = jnp.maximum(h_avg, 0.0) + jnp.maximum(h_max, 0.0)   # (Bt, Cr, 1)
    y = jnp.sum(h[:, None] * w2[None], axis=2)              # (Bt, C, 1)
    ca = _sigmoid(y)                                        # (Bt, C, 1)
    x1 = xb * ca                                            # (Bt, C, S)

    # ---- spatial attention: channel mean/max, 7x7 conv on flattened S ------
    sp_avg = jnp.mean(x1, axis=1, keepdims=True)            # (Bt, 1, S)
    sp_max = jnp.max(x1, axis=1, keepdims=True)             # (Bt, 1, S)

    # zero-padded 1-D scratch (halo of MAXOFF zeros on each side); zeroing the
    # tiny scratch every step keeps it correct under megacore grid splitting.
    pad_a_ref[...] = jnp.zeros(pad_a_ref.shape, pad_a_ref.dtype)
    pad_m_ref[...] = jnp.zeros(pad_m_ref.shape, pad_m_ref.dtype)
    pad_a_ref[:, :, MAXOFF:MAXOFF + S] = sp_avg
    pad_m_ref[:, :, MAXOFF:MAXOFF + S] = sp_max

    # out[h,w] = sum_{dh,dw} k[dh,dw] * in[h+dh, w+dw] (zero outside).
    # On the flattened axis this is a constant shift dh*W+dw; the zero halo
    # handles the h-direction overflow, the per-dw mask kills w wrap-around.
    acc = jnp.zeros(sp_avg.shape, jnp.float32)               # (Bt, 1, S)
    for dw in range(-P, P + 1):
        m = mask_ref[dw + P:dw + P + 1, :]                   # (1, S)
        inner = jnp.zeros(sp_avg.shape, jnp.float32)
        for dh in range(-P, P + 1):
            off = MAXOFF + dh * W + dw
            ka = wsp_ref[(dh + P) * K + (dw + P)]            # avg-channel tap
            km = wsp_ref[K * K + (dh + P) * K + (dw + P)]    # max-channel tap
            inner = (inner
                     + ka * pad_a_ref[:, :, off:off + S]
                     + km * pad_m_ref[:, :, off:off + S])
        acc = acc + m * inner

    sa = _sigmoid(acc)                                       # (Bt, 1, S)
    o_ref[...] = (x1 * sa).astype(o_ref.dtype)               # single HBM write


# ----------------------------------------------------------------------------
# Wrapper
# ----------------------------------------------------------------------------
def _pick_block_batch(B, C, S, itemsize, vmem_budget_bytes=8 * 1024 * 1024):
    # in + out, double buffered, f32 compute copies.
    per_batch = 4 * C * S * max(int(itemsize), 4)
    bt = max(1, min(B, vmem_budget_bytes // max(per_batch, 1)))
    if B >= 2:
        bt = min(bt, max(1, B // 2))   # keep >= 2 grid steps (v7x megacore)
    while B % bt:
        bt -= 1
    return bt


def cbam_forward(x, w1, w2, wsp, *, kernel_size=7, block_batch=None):
    B, C, H, W = x.shape
    S = H * W
    Cr = w1.shape[0]
    K = kernel_size
    assert K % 2 == 1
    P = K // 2
    MAXOFF = P * W + P
    L = S + 2 * MAXOFF

    Bt = block_batch if block_batch is not None else _pick_block_batch(
        B, C, S, jnp.dtype(x.dtype).itemsize)
    assert B % Bt == 0

    # Lane-dense view of the input; weights pre-shaped so the kernel never
    # needs a lane<->sublane relayout.
    x_cs = x.reshape(B, C, S)
    w1_k = w1.reshape(Cr, C, 1).astype(jnp.float32)
    w2_k = w2.reshape(C, Cr, 1).astype(jnp.float32)
    wsp_flat = wsp.reshape(-1).astype(jnp.float32)           # (2*K*K,) SMEM scalars

    # Per-dw column-validity masks (only 2P+1 of them), computed on host.
    w_idx = np.arange(S, dtype=np.int64) % W
    masks = np.stack(
        [((w_idx + dw >= 0) & (w_idx + dw < W)).astype(np.float32)
         for dw in range(-P, P + 1)], axis=0)                # (K, S)
    masks = jnp.asarray(masks)

    kernel = functools.partial(cbam_fused_kernel, H=H, W=W, ksize=K)

    out = pl.pallas_call(
        kernel,
        out_shape=jax.ShapeDtypeStruct((B, C, S), x.dtype),
        grid=(B // Bt,),
        in_specs=[
            pl.BlockSpec(memory_space=pltpu.MemorySpace.SMEM),   # conv taps
            pl.BlockSpec((Cr, C, 1), lambda b: (0, 0, 0)),       # fc1 weights
            pl.BlockSpec((C, Cr, 1), lambda b: (0, 0, 0)),       # fc2 weights
            pl.BlockSpec((K, S), lambda b: (0, 0)),              # dw masks
            pl.BlockSpec((Bt, C, S), lambda b: (b, 0, 0)),       # x slab
        ],
        out_specs=pl.BlockSpec((Bt, C, S), lambda b: (b, 0, 0)),
        scratch_shapes=[
            pltpu.VMEM((Bt, 1, L), jnp.float32),   # padded channel-avg plane
            pltpu.VMEM((Bt, 1, L), jnp.float32),   # padded channel-max plane
        ],
        compiler_params=pltpu.CompilerParams(
            dimension_semantics=("parallel",),
            vmem_limit_bytes=32 * 1024 * 1024),
    )(wsp_flat, w1_k, w2_k, masks, x_cs)
    return out.reshape(B, C, H, W)


# ----------------------------------------------------------------------------
# Pure-JAX reference (for verification)
# ----------------------------------------------------------------------------
def cbam_reference(x, w1, w2, wsp):
    avg = jnp.mean(x, axis=(2, 3), keepdims=True)
    mx = jnp.max(x, axis=(2, 3), keepdims=True)

    def mlp(v):
        v2 = v[:, :, 0, 0]                       # (B, C)
        h = jnp.maximum(v2 @ w1.T, 0.0)          # (B, Cr)
        return h @ w2.T                          # (B, C)

    ca = jax.nn.sigmoid(mlp(avg) + mlp(mx))[:, :, None, None]
    x1 = x * ca
    sp = jnp.concatenate(
        [jnp.mean(x1, axis=1, keepdims=True), jnp.max(x1, axis=1, keepdims=True)],
        axis=1)
    P = wsp.shape[-1] // 2
    conv = lax.conv_general_dilated(
        sp, wsp[None], (1, 1), [(P, P), (P, P)],
        dimension_numbers=("NCHW", "OIHW", "NCHW"))
    sa = jax.nn.sigmoid(conv)
    return x1 * sa


if __name__ == "__main__":
    key = jax.random.PRNGKey(0)
    kx, k1, k2, k3 = jax.random.split(key, 4)

    # test 1: B=2, C=16, 16x16 spatial, ratio=8, kernel 7
    B, C, H, W = 2, 16, 16, 16
    ratio, ksize = 8, 7
    Cr = C // ratio

    x = jax.random.normal(kx, (B, C, H, W), jnp.float32)
    w1 = jax.random.normal(k1, (Cr, C), jnp.float32) * (1.0 / np.sqrt(C))
    w2 = jax.random.normal(k2, (C, Cr), jnp.float32) * (1.0 / np.sqrt(Cr))
    wsp = jax.random.normal(k3, (2, ksize, ksize), jnp.float32) * 0.1

    out = jax.block_until_ready(cbam_forward(x, w1, w2, wsp, kernel_size=ksize))
    ref = cbam_reference(x, w1, w2, wsp)
    assert out.shape == x.shape and out.dtype == x.dtype
    if not jnp.allclose(out, ref, atol=1e-4, rtol=1e-3):
        raise AssertionError(
            f"mismatch, max abs err {float(jnp.max(jnp.abs(out - ref)))}")

    # test 2: exercises Bt>1 batch blocking and a different spatial size
    B2, C2, H2, W2 = 4, 32, 8, 8
    Cr2 = C2 // ratio
    x2 = jax.random.normal(kx, (B2, C2, H2, W2), jnp.float32)
    w1b = jax.random.normal(k1, (Cr2, C2), jnp.float32) * (1.0 / np.sqrt(C2))
    w2b = jax.random.normal(k2, (C2, Cr2), jnp.float32) * (1.0 / np.sqrt(Cr2))
    wspb = jax.random.normal(k3, (2, ksize, ksize), jnp.float32) * 0.1
    out2 = jax.block_until_ready(
        cbam_forward(x2, w1b, w2b, wspb, kernel_size=ksize))
    ref2 = cbam_reference(x2, w1b, w2b, wspb)
    if not jnp.allclose(out2, ref2, atol=1e-4, rtol=1e-3):
        raise AssertionError(
            f"mismatch(2), max abs err {float(jnp.max(jnp.abs(out2 - ref2)))}")

    print("KERNEL_OK")
</pallas_src>

<mosaic_0001>
module attributes {stable_mosaic.version = 11 : i64} {
  func.func @cbam_fused_kernel(%arg0: i32, %arg1: memref<98xf32, #tpu.memory_space<smem>>, %arg2: memref<2x16x1xf32, #tpu.memory_space<vmem>>, %arg3: memref<16x2x1xf32, #tpu.memory_space<vmem>>, %arg4: memref<7x256xf32, #tpu.memory_space<vmem>>, %arg5: memref<1x16x256xf32, #tpu.memory_space<vmem>>, %arg6: memref<1x16x256xf32, #tpu.memory_space<vmem>>, %arg7: memref<1x1x358xf32, #tpu.memory_space<vmem>>, %arg8: memref<1x1x358xf32, #tpu.memory_space<vmem>>) attributes {dimension_semantics = [#tpu.dimension_semantics<parallel>], iteration_bounds = array<i64: 2>, scalar_prefetch = 0 : i64, scratch_operands = 2 : i64, tpu.core_type = #tpu.core_type<tc>, window_params = [{transform_indices = @transform_0, window_bounds = array<i64: 98>}, {pipeline_mode = #tpu.pipeline_mode<synchronous>, transform_indices = @transform_1, window_bounds = array<i64: 2, 16, 1>}, {pipeline_mode = #tpu.pipeline_mode<synchronous>, transform_indices = @transform_2, window_bounds = array<i64: 16, 2, 1>}, {pipeline_mode = #tpu.pipeline_mode<synchronous>, transform_indices = @transform_3, window_bounds = array<i64: 7, 256>}, {transform_indices = @transform_4, window_bounds = array<i64: 1, 16, 256>}, {transform_indices = @transform_5, window_bounds = array<i64: 1, 16, 256>}]} {
    %c0 = arith.constant 0 : index
    %c0_0 = arith.constant 0 : index
    %c0_1 = arith.constant 0 : index
    %0 = vector.load %arg5[%c0, %c0_0, %c0_1] : memref<1x16x256xf32, #tpu.memory_space<vmem>>, vector<1x16x256xf32>
    %cst = arith.constant dense<0.000000e+00> : vector<1x16xf32>
    %1 = vector.multi_reduction <add>, %0, %cst [2] : vector<1x16x256xf32> to vector<1x16xf32>
    %2 = vector.shape_cast %1 : vector<1x16xf32> to vector<1x16x1xf32>
    %cst_2 = arith.constant 2.560000e+02 : f32
    %3 = vector.broadcast %cst_2 : f32 to vector<1x16x1xf32>
    %4 = arith.divf %2, %3 : vector<1x16x1xf32>
    %cst_3 = arith.constant dense<0xFF800000> : vector<1x16xf32>
    %5 = vector.multi_reduction <maximumf>, %0, %cst_3 [2] : vector<1x16x256xf32> to vector<1x16xf32>
    %6 = vector.shape_cast %5 : vector<1x16xf32> to vector<1x16x1xf32>
    %c0_4 = arith.constant 0 : index
    %c0_5 = arith.constant 0 : index
    %c0_6 = arith.constant 0 : index
    %7 = vector.load %arg2[%c0_4, %c0_5, %c0_6] : memref<2x16x1xf32, #tpu.memory_space<vmem>>, vector<2x16x1xf32>
    %c0_7 = arith.constant 0 : index
    %c0_8 = arith.constant 0 : index
    %c0_9 = arith.constant 0 : index
    %8 = vector.load %arg3[%c0_7, %c0_8, %c0_9] : memref<16x2x1xf32, #tpu.memory_space<vmem>>, vector<16x2x1xf32>
    %9 = vector.shape_cast %4 : vector<1x16x1xf32> to vector<1x1x16x1xf32>
    %10 = vector.shape_cast %7 : vector<2x16x1xf32> to vector<1x2x16x1xf32>
    %11 = vector.broadcast %9 : vector<1x1x16x1xf32> to vector<1x2x16x1xf32>
    %12 = arith.mulf %11, %10 : vector<1x2x16x1xf32>
    %cst_10 = arith.constant dense<0.000000e+00> : vector<1x2x1xf32>
    %13 = vector.multi_reduction <add>, %12, %cst_10 [2] : vector<1x2x16x1xf32> to vector<1x2x1xf32>
    %14 = vector.shape_cast %6 : vector<1x16x1xf32> to vector<1x1x16x1xf32>
    %15 = vector.shape_cast %7 : vector<2x16x1xf32> to vector<1x2x16x1xf32>
    %16 = vector.broadcast %14 : vector<1x1x16x1xf32> to vector<1x2x16x1xf32>
    %17 = arith.mulf %16, %15 : vector<1x2x16x1xf32>
    %cst_11 = arith.constant dense<0.000000e+00> : vector<1x2x1xf32>
    %18 = vector.multi_reduction <add>, %17, %cst_11 [2] : vector<1x2x16x1xf32> to vector<1x2x1xf32>
    %cst_12 = arith.constant 0.000000e+00 : f32
    %19 = vector.broadcast %cst_12 : f32 to vector<1x2x1xf32>
    %20 = arith.maximumf %13, %19 : vector<1x2x1xf32>
    %cst_13 = arith.constant 0.000000e+00 : f32
    %21 = vector.broadcast %cst_13 : f32 to vector<1x2x1xf32>
    %22 = arith.maximumf %18, %21 : vector<1x2x1xf32>
    %23 = arith.addf %20, %22 : vector<1x2x1xf32>
    %24 = vector.shape_cast %23 : vector<1x2x1xf32> to vector<1x1x2x1xf32>
    %25 = vector.shape_cast %8 : vector<16x2x1xf32> to vector<1x16x2x1xf32>
    %26 = vector.broadcast %24 : vector<1x1x2x1xf32> to vector<1x16x2x1xf32>
    %27 = arith.mulf %26, %25 : vector<1x16x2x1xf32>
    %cst_14 = arith.constant dense<0.000000e+00> : vector<1x16x1xf32>
    %28 = vector.multi_reduction <add>, %27, %cst_14 [2] : vector<1x16x2x1xf32> to vector<1x16x1xf32>
    %cst_15 = arith.constant 0.000000e+00 : f32
    %29 = vector.broadcast %cst_15 : f32 to vector<1x16x1xf32>
    %30 = arith.subf %29, %28 : vector<1x16x1xf32>
    %31 = math.exp %30 : vector<1x16x1xf32>
    %cst_16 = arith.constant 1.000000e+00 : f32
    %32 = vector.broadcast %cst_16 : f32 to vector<1x16x1xf32>
    %33 = arith.addf %32, %31 : vector<1x16x1xf32>
    %cst_17 = arith.constant 1.000000e+00 : f32
    %34 = vector.broadcast %cst_17 : f32 to vector<1x16x1xf32>
    %35 = arith.divf %34, %33 : vector<1x16x1xf32>
    %36 = vector.broadcast %35 : vector<1x16x1xf32> to vector<1x16x256xf32>
    %37 = arith.mulf %0, %36 : vector<1x16x256xf32>
    %cst_18 = arith.constant dense<0.000000e+00> : vector<1x256xf32>
    %38 = vector.multi_reduction <add>, %37, %cst_18 [1] : vector<1x16x256xf32> to vector<1x256xf32>
    %39 = vector.shape_cast %38 : vector<1x256xf32> to vector<1x1x256xf32>
    %cst_19 = arith.constant 1.600000e+01 : f32
    %40 = vector.broadcast %cst_19 : f32 to vector<1x1x256xf32>
    %41 = arith.divf %39, %40 : vector<1x1x256xf32>
    %cst_20 = arith.constant dense<0xFF800000> : vector<1x256xf32>
    %42 = vector.multi_reduction <maximumf>, %37, %cst_20 [1] : vector<1x16x256xf32> to vector<1x256xf32>
    %43 = vector.shape_cast %42 : vector<1x256xf32> to vector<1x1x256xf32>
    %cst_21 = arith.constant 0.000000e+00 : f32
    %44 = vector.broadcast %cst_21 : f32 to vector<1x1x358xf32>
    %c0_22 = arith.constant 0 : index
    %c0_23 = arith.constant 0 : index
    %c0_24 = arith.constant 0 : index
    %45 = vector.load %arg7[%c0_22, %c0_23, %c0_24] : memref<1x1x358xf32, #tpu.memory_space<vmem>>, vector<1x1x358xf32>
    tpu.vector_store %arg7[%c0_22, %c0_23, %c0_24], %44 {strides = array<i32>} : memref<1x1x358xf32, #tpu.memory_space<vmem>>, vector<1x1x358xf32>,
    %cst_25 = arith.constant 0.000000e+00 : f32
    %46 = vector.broadcast %cst_25 : f32 to vector<1x1x358xf32>
    %c0_26 = arith.constant 0 : index
    %c0_27 = arith.constant 0 : index
    %c0_28 = arith.constant 0 : index
    %47 = vector.load %arg8[%c0_26, %c0_27, %c0_28] : memref<1x1x358xf32, #tpu.memory_space<vmem>>, vector<1x1x358xf32>
    tpu.vector_store %arg8[%c0_26, %c0_27, %c0_28], %46 {strides = array<i32>} : memref<1x1x358xf32, #tpu.memory_space<vmem>>, vector<1x1x358xf32>,
    %c0_29 = arith.constant 0 : index
    %c0_30 = arith.constant 0 : index
    %c51 = arith.constant 51 : index
    %48 = vector.load %arg7[%c0_29, %c0_30, %c51] : memref<1x1x358xf32, #tpu.memory_space<vmem>>, vector<1x1x256xf32>
    tpu.vector_store %arg7[%c0_29, %c0_30, %c51], %41 {strides = array<i32>} : memref<1x1x358xf32, #tpu.memory_space<vmem>>, vector<1x1x256xf32>,
    %c0_31 = arith.constant 0 : index
    %c0_32 = arith.constant 0 : index
    %c51_33 = arith.constant 51 : index
    %49 = vector.load %arg8[%c0_31, %c0_32, %c51_33] : memref<1x1x358xf32, #tpu.memory_space<vmem>>, vector<1x1x256xf32>
    tpu.vector_store %arg8[%c0_31, %c0_32, %c51_33], %43 {strides = array<i32>} : memref<1x1x358xf32, #tpu.memory_space<vmem>>, vector<1x1x256xf32>,
    %cst_34 = arith.constant 0.000000e+00 : f32
    %50 = vector.broadcast %cst_34 : f32 to vector<1x1x256xf32>
    %c0_35 = arith.constant 0 : index
    %c0_36 = arith.constant 0 : index
    %51 = vector.load %arg4[%c0_35, %c0_36] : memref<7x256xf32, #tpu.memory_space<vmem>>, vector<1x256xf32>
    %cst_37 = arith.constant 0.000000e+00 : f32
    %52 = vector.broadcast %cst_37 : f32 to vector<1x1x256xf32>
    %c0_38 = arith.constant 0 : index
    %53 = memref.load %arg1[%c0_38] : memref<98xf32, #tpu.memory_space<smem>>
    %c49 = arith.constant 49 : index
    %54 = memref.load %arg1[%c49] : memref<98xf32, #tpu.memory_space<smem>>
    %c0_39 = arith.constant 0 : index
    %c0_40 = arith.constant 0 : index
    %c0_41 = arith.constant 0 : index
    %55 = vector.load %arg7[%c0_39, %c0_40, %c0_41] : memref<1x1x358xf32, #tpu.memory_space<vmem>>, vector<1x1x256xf32>
    %56 = vector.broadcast %53 : f32 to vector<1x1x256xf32>
    %57 = arith.mulf %56, %55 : vector<1x1x256xf32>
    %58 = arith.addf %52, %57 : vector<1x1x256xf32>
    %c0_42 = arith.constant 0 : index
    %c0_43 = arith.constant 0 : index
    %c0_44 = arith.constant 0 : index
    %59 = vector.load %arg8[%c0_42, %c0_43, %c0_44] : memref<1x1x358xf32, #tpu.memory_space<vmem>>, vector<1x1x256xf32>
    %60 = vector.broadcast %54 : f32 to vector<1x1x256xf32>
    %61 = arith.mulf %60, %59 : vector<1x1x256xf32>
    %62 = arith.addf %58, %61 : vector<1x1x256xf32>
    %c7 = arith.constant 7 : index
    %63 = memref.load %arg1[%c7] : memref<98xf32, #tpu.memory_space<smem>>
    %c56 = arith.constant 56 : index
    %64 = memref.load %arg1[%c56] : memref<98xf32, #tpu.memory_space<smem>>
    %c0_45 = arith.constant 0 : index
    %c0_46 = arith.constant 0 : index
    %c16 = arith.constant 16 : index
    %65 = vector.load %arg7[%c0_45, %c0_46, %c16] : memref<1x1x358xf32, #tpu.memory_space<vmem>>, vector<1x1x256xf32>
    %66 = vector.broadcast %63 : f32 to vector<1x1x256xf32>
    %67 = arith.mulf %66, %65 : vector<1x1x256xf32>
    %68 = arith.addf %62, %67 : vector<1x1x256xf32>
    %c0_47 = arith.constant 0 : index
    %c0_48 = arith.constant 0 : index
    %c16_49 = arith.constant 16 : index
    %69 = vector.load %arg8[%c0_47, %c0_48, %c16_49] : memref<1x1x358xf32, #tpu.memory_space<vmem>>, vector<1x1x256xf32>
    %70 = vector.broadcast %64 : f32 to vector<1x1x256xf32>
    %71 = arith.mulf %70, %69 : vector<1x1x256xf32>
    %72 = arith.addf %68, %71 : vector<1x1x256xf32>
    %c14 = arith.constant 14 : index
    %73 = memref.load %arg1[%c14] : memref<98xf32, #tpu.memory_space<smem>>
    %c63 = arith.constant 63 : index
    %74 = memref.load %arg1[%c63] : memref<98xf32, #tpu.memory_space<smem>>
    %c0_50 = arith.constant 0 : index
    %c0_51 = arith.constant 0 : index
    %c32 = arith.constant 32 : index
    %75 = vector.load %arg7[%c0_50, %c0_51, %c32] : memref<1x1x358xf32, #tpu.memory_space<vmem>>, vector<1x1x256xf32>
    %76 = vector.broadcast %73 : f32 to vector<1x1x256xf32>
    %77 = arith.mulf %76, %75 : vector<1x1x256xf32>
    %78 = arith.addf %72, %77 : vector<1x1x256xf32>
    %c0_52 = arith.constant 0 : index
    %c0_53 = arith.constant 0 : index
    %c32_54 = arith.constant 32 : index
    %79 = vector.load %arg8[%c0_52, %c0_53, %c32_54] : memref<1x1x358xf32, #tpu.memory_space<vmem>>, vector<1x1x256xf32>
    %80 = vector.broadcast %74 : f32 to vector<1x1x256xf32>
    %81 = arith.mulf %80, %79 : vector<1x1x256xf32>
    %82 = arith.addf %78, %81 : vector<1x1x256xf32>
    %c21 = arith.constant 21 : index
    %83 = memref.load %arg1[%c21] : memref<98xf32, #tpu.memory_space<smem>>
    %c70 = arith.constant 70 : index
    %84 = memref.load %arg1[%c70] : memref<98xf32, #tpu.memory_space<smem>>
    %c0_55 = arith.constant 0 : index
    %c0_56 = arith.constant 0 : index
    %c48 = arith.constant 48 : index
    %85 = vector.load %arg7[%c0_55, %c0_56, %c48] : memref<1x1x358xf32, #tpu.memory_space<vmem>>, vector<1x1x256xf32>
    %86 = vector.broadcast %83 : f32 to vector<1x1x256xf32>
    %87 = arith.mulf %86, %85 : vector<1x1x256xf32>
    %88 = arith.addf %82, %87 : vector<1x1x256xf32>
    %c0_57 = arith.constant 0 : index
    %c0_58 = arith.constant 0 : index
    %c48_59 = arith.constant 48 : index
    %89 = vector.load %arg8[%c0_57, %c0_58, %c48_59] : memref<1x1x358xf32, #tpu.memory_space<vmem>>, vector<1x1x256xf32>
    %90 = vector.broadcast %84 : f32 to vector<1x1x256xf32>
    %91 = arith.mulf %90, %89 : vector<1x1x256xf32>
    %92 = arith.addf %88, %91 : vector<1x1x256xf32>
    %c28 = arith.constant 28 : index
    %93 = memref.load %arg1[%c28] : memref<98xf32, #tpu.memory_space<smem>>
    %c77 = arith.constant 77 : index
    %94 = memref.load %arg1[%c77] : memref<98xf32, #tpu.memory_space<smem>>
    %c0_60 = arith.constant 0 : index
    %c0_61 = arith.constant 0 : index
    %c64 = arith.constant 64 : index
    %95 = vector.load %arg7[%c0_60, %c0_61, %c64] : memref<1x1x358xf32, #tpu.memory_space<vmem>>, vector<1x1x256xf32>
    %96 = vector.broadcast %93 : f32 to vector<1x1x256xf32>
    %97 = arith.mulf %96, %95 : vector<1x1x256xf32>
    %98 = arith.addf %92, %97 : vector<1x1x256xf32>
    %c0_62 = arith.constant 0 : index
    %c0_63 = arith.constant 0 : index
    %c64_64 = arith.constant 64 : index
    %99 = vector.load %arg8[%c0_62, %c0_63, %c64_64] : memref<1x1x358xf32, #tpu.memory_space<vmem>>, vector<1x1x256xf32>
    %100 = vector.broadcast %94 : f32 to vector<1x1x256xf32>
    %101 = arith.mulf %100, %99 : vector<1x1x256xf32>
    %102 = arith.addf %98, %101 : vector<1x1x256xf32>
    %c35 = arith.constant 35 : index
    %103 = memref.load %arg1[%c35] : memref<98xf32, #tpu.memory_space<smem>>
    %c84 = arith.constant 84 : index
    %104 = memref.load %arg1[%c84] : memref<98xf32, #tpu.memory_space<smem>>
    %c0_65 = arith.constant 0 : index
    %c0_66 = arith.constant 0 : index
    %c80 = arith.constant 80 : index
    %105 = vector.load %arg7[%c0_65, %c0_66, %c80] : memref<1x1x358xf32, #tpu.memory_space<vmem>>, vector<1x1x256xf32>
    %106 = vector.broadcast %103 : f32 to vector<1x1x256xf32>
    %107 = arith.mulf %106, %105 : vector<1x1x256xf32>
    %108 = arith.addf %102, %107 : vector<1x1x256xf32>
    %c0_67 = arith.constant 0 : index
    %c0_68 = arith.constant 0 : index
    %c80_69 = arith.constant 80 : index
    %109 = vector.load %arg8[%c0_67, %c0_68, %c80_69] : memref<1x1x358xf32, #tpu.memory_space<vmem>>, vector<1x1x256xf32>
    %110 = vector.broadcast %104 : f32 to vector<1x1x256xf32>
    %111 = arith.mulf %110, %109 : vector<1x1x256xf32>
    %112 = arith.addf %108, %111 : vector<1x1x256xf32>
    %c42 = arith.constant 42 : index
    %113 = memref.load %arg1[%c42] : memref<98xf32, #tpu.memory_space<smem>>
    %c91 = arith.constant 91 : index
    %114 = memref.load %arg1[%c91] : memref<98xf32, #tpu.memory_space<smem>>
    %c0_70 = arith.constant 0 : index
    %c0_71 = arith.constant 0 : index
    %c96 = arith.constant 96 : index
    %115 = vector.load %arg7[%c0_70, %c0_71, %c96] : memref<1x1x358xf32, #tpu.memory_space<vmem>>, vector<1x1x256xf32>
    %116 = vector.broadcast %113 : f32 to vector<1x1x256xf32>
    %117 = arith.mulf %116, %115 : vector<1x1x256xf32>
    %118 = arith.addf %112, %117 : vector<1x1x256xf32>
    %c0_72 = arith.constant 0 : index
    %c0_73 = arith.constant 0 : index
    %c96_74 = arith.constant 96 : index
    %119 = vector.load %arg8[%c0_72, %c0_73, %c96_74] : memref<1x1x358xf32, #tpu.memory_space<vmem>>, vector<1x1x256xf32>
    %120 = vector.broadcast %114 : f32 to vector<1x1x256xf32>
    %121 = arith.mulf %120, %119 : vector<1x1x256xf32>
    %122 = arith.addf %118, %121 : vector<1x1x256xf32>
    %123 = vector.shape_cast %51 : vector<1x256xf32> to vector<1x1x256xf32>
    %124 = arith.mulf %123, %122 : vector<1x1x256xf32>
    %125 = arith.addf %50, %124 : vector<1x1x256xf32>
    %c1 = arith.constant 1 : index
    %c0_75 = arith.constant 0 : index
    %126 = vector.load %arg4[%c1, %c0_75] : memref<7x256xf32, #tpu.memory_space<vmem>>, vector<1x256xf32>
    %cst_76 = arith.constant 0.000000e+00 : f32
    %127 = vector.broadcast %cst_76 : f32 to vector<1x1x256xf32>
    %c1_77 = arith.constant 1 : index
    %128 = memref.load %arg1[%c1_77] : memref<98xf32, #tpu.memory_space<smem>>
    %c50 = arith.constant 50 : index
    %129 = memref.load %arg1[%c50] : memref<98xf32, #tpu.memory_space<smem>>
    %c0_78 = arith.constant 0 : index
    %c0_79 = arith.constant 0 : index
    %c1_80 = arith.constant 1 : index
    %130 = vector.load %arg7[%c0_78, %c0_79, %c1_80] : memref<1x1x358xf32, #tpu.memory_space<vmem>>, vector<1x1x256xf32>
    %131 = vector.broadcast %128 : f32 to vector<1x1x256xf32>
    %132 = arith.mulf %131, %130 : vector<1x1x256xf32>
    %133 = arith.addf %127, %132 : vector<1x1x256xf32>
    %c0_81 = arith.constant 0 : index
    %c0_82 = arith.constant 0 : index
    %c1_83 = arith.constant 1 : index
    %134 = vector.load %arg8[%c0_81, %c0_82, %c1_83] : memref<1x1x358xf32, #tpu.memory_space<vmem>>, vector<1x1x256xf32>
    %135 = vector.broadcast %129 : f32 to vector<1x1x256xf32>
    %136 = arith.mulf %135, %134 : vector<1x1x256xf32>
    %137 = arith.addf %133, %136 : vector<1x1x256xf32>
    %c8 = arith.constant 8 : index
    %138 = memref.load %arg1[%c8] : memref<98xf32, #tpu.memory_space<smem>>
    %c57 = arith.constant 57 : index
    %139 = memref.load %arg1[%c57] : memref<98xf32, #tpu.memory_space<smem>>
    %c0_84 = arith.constant 0 : index
    %c0_85 = arith.constant 0 : index
    %c17 = arith.constant 17 : index
    %140 = vector.load %arg7[%c0_84, %c0_85, %c17] : memref<1x1x358xf32, #tpu.memory_space<vmem>>, vector<1x1x256xf32>
    %141 = vector.broadcast %138 : f32 to vector<1x1x256xf32>
    %142 = arith.mulf %141, %140 : vector<1x1x256xf32>
    %143 = arith.addf %137, %142 : vector<1x1x256xf32>
    %c0_86 = arith.constant 0 : index
    %c0_87 = arith.constant 0 : index
    %c17_88 = arith.constant 17 : index
    %144 = vector.load %arg8[%c0_86, %c0_87, %c17_88] : memref<1x1x358xf32, #tpu.memory_space<vmem>>, vector<1x1x256xf32>
    %145 = vector.broadcast %139 : f32 to vector<1x1x256xf32>
    %146 = arith.mulf %145, %144 : vector<1x1x256xf32>
    %147 = arith.addf %143, %146 : vector<1x1x256xf32>
    %c15 = arith.constant 15 : index
    %148 = memref.load %arg1[%c15] : memref<98xf32, #tpu.memory_space<smem>>
    %c64_89 = arith.constant 64 : index
    %149 = memref.load %arg1[%c64_89] : memref<98xf32, #tpu.memory_space<smem>>
    %c0_90 = arith.constant 0 : index
    %c0_91 = arith.constant 0 : index
    %c33 = arith.constant 33 : index
    %150 = vector.load %arg7[%c0_90, %c0_91, %c33] : memref<1x1x358xf32, #tpu.memory_space<vmem>>, vector<1x1x256xf32>
    %151 = vector.broadcast %148 : f32 to vector<1x1x256xf32>
    %152 = arith.mulf %151, %150 : vector<1x1x256xf32>
    %153 = arith.addf %147, %152 : vector<1x1x256xf32>
    %c0_92 = arith.constant 0 : index
    %c0_93 = arith.constant 0 : index
    %c33_94 = arith.constant 33 : index
    %154 = vector.load %arg8[%c0_92, %c0_93, %c33_94] : memref<1x1x358xf32, #tpu.memory_space<vmem>>, vector<1x1x256xf32>
    %155 = vector.broadcast %149 : f32 to vector<1x1x256xf32>
    %156 = arith.mulf %155, %154 : vector<1x1x256xf32>
    %157 = arith.addf %153, %156 : vector<1x1x256xf32>
    %c22 = arith.constant 22 : index
    %158 = memref.load %arg1[%c22] : memref<98xf32, #tpu.memory_space<smem>>
    %c71 = arith.constant 71 : index
    %159 = memref.load %arg1[%c71] : memref<98xf32, #tpu.memory_space<smem>>
    %c0_95 = arith.constant 0 : index
    %c0_96 = arith.constant 0 : index
    %c49_97 = arith.constant 49 : index
    %160 = vector.load %arg7[%c0_95, %c0_96, %c49_97] : memref<1x1x358xf32, #tpu.memory_space<vmem>>, vector<1x1x256xf32>
    %161 = vector.broadcast %158 : f32 to vector<1x1x256xf32>
    %162 = arith.mulf %161, %160 : vector<1x1x256xf32>
    %163 = arith.addf %157, %162 : vector<1x1x256xf32>
    %c0_98 = arith.constant 0 : index
    %c0_99 = arith.constant 0 : index
    %c49_100 = arith.constant 49 : index
    %164 = vector.load %arg8[%c0_98, %c0_99, %c49_100] : memref<1x1x358xf32, #tpu.memory_space<vmem>>, vector<1x1x256xf32>
    %165 = vector.broadcast %159 : f32 to vector<1x1x256xf32>
    %166 = arith.mulf %165, %164 : vector<1x1x256xf32>
    %167 = arith.addf %163, %166 : vector<1x1x256xf32>
    %c29 = arith.constant 29 : index
    %168 = memref.load %arg1[%c29] : memref<98xf32, #tpu.memory_space<smem>>
    %c78 = arith.constant 78 : index
    %169 = memref.load %arg1[%c78] : memref<98xf32, #tpu.memory_space<smem>>
    %c0_101 = arith.constant 0 : index
    %c0_102 = arith.constant 0 : index
    %c65 = arith.constant 65 : index
    %170 = vector.load %arg7[%c0_101, %c0_102, %c65] : memref<1x1x358xf32, #tpu.memory_space<vmem>>, vector<1x1x256xf32>
    %171 = vector.broadcast %168 : f32 to vector<1x1x256xf32>
    %172 = arith.mulf %171, %170 : vector<1x1x256xf32>
    %173 = arith.addf %167, %172 : vector<1x1x256xf32>
    %c0_103 = arith.constant 0 : index
    %c0_104 = arith.constant 0 : index
    %c65_105 = arith.constant 65 : index
    %174 = vector.load %arg8[%c0_103, %c0_104, %c65_105] : memref<1x1x358xf32, #tpu.memory_space<vmem>>, vector<1x1x256xf32>
    %175 = vector.broadcast %169 : f32 to vector<1x1x256xf32>
    %176 = arith.mulf %175, %174 : vector<1x1x256xf32>
    %177 = arith.addf %173, %176 : vector<1x1x256xf32>
    %c36 = arith.constant 36 : index
    %178 = memref.load %arg1[%c36] : memref<98xf32, #tpu.memory_space<smem>>
    %c85 = arith.constant 85 : index
    %179 = memref.load %arg1[%c85] : memref<98xf32, #tpu.memory_space<smem>>
    %c0_106 = arith.constant 0 : index
    %c0_107 = arith.constant 0 : index
    %c81 = arith.constant 81 : index
    %180 = vector.load %arg7[%c0_106, %c0_107, %c81] : memref<1x1x358xf32, #tpu.memory_space<vmem>>, vector<1x1x256xf32>
    %181 = vector.broadcast %178 : f32 to vector<1x1x256xf32>
    %182 = arith.mulf %181, %180 : vector<1x1x256xf32>
    %183 = arith.addf %177, %182 : vector<1x1x256xf32>
    %c0_108 = arith.constant 0 : index
    %c0_109 = arith.constant 0 : index
    %c81_110 = arith.constant 81 : index
    %184 = vector.load %arg8[%c0_108, %c0_109, %c81_110] : memref<1x1x358xf32, #tpu.memory_space<vmem>>, vector<1x1x256xf32>
    %185 = vector.broadcast %179 : f32 to vector<1x1x256xf32>
    %186 = arith.mulf %185, %184 : vector<1x1x256xf32>
    %187 = arith.addf %183, %186 : vector<1x1x256xf32>
    %c43 = arith.constant 43 : index
    %188 = memref.load %arg1[%c43] : memref<98xf32, #tpu.memory_space<smem>>
    %c92 = arith.constant 92 : index
    %189 = memref.load %arg1[%c92] : memref<98xf32, #tpu.memory_space<smem>>
    %c0_111 = arith.constant 0 : index
    %c0_112 = arith.constant 0 : index
    %c97 = arith.constant 97 : index
    %190 = vector.load %arg7[%c0_111, %c0_112, %c97] : memref<1x1x358xf32, #tpu.memory_space<vmem>>, vector<1x1x256xf32>
    %191 = vector.broadcast %188 : f32 to vector<1x1x256xf32>
    %192 = arith.mulf %191, %190 : vector<1x1x256xf32>
    %193 = arith.addf %187, %192 : vector<1x1x256xf32>
    %c0_113 = arith.constant 0 : index
    %c0_114 = arith.constant 0 : index
    %c97_115 = arith.constant 97 : index
    %194 = vector.load %arg8[%c0_113, %c0_114, %c97_115] : memref<1x1x358xf32, #tpu.memory_space<vmem>>, vector<1x1x256xf32>
    %195 = vector.broadcast %189 : f32 to vector<1x1x256xf32>
    %196 = arith.mulf %195, %194 : vector<1x1x256xf32>
    %197 = arith.addf %193, %196 : vector<1x1x256xf32>
    %198 = vector.shape_cast %126 : vector<1x256xf32> to vector<1x1x256xf32>
    %199 = arith.mulf %198, %197 : vector<1x1x256xf32>
    %200 = arith.addf %125, %199 : vector<1x1x256xf32>
    %c2 = arith.constant 2 : index
    %c0_116 = arith.constant 0 : index
    %201 = vector.load %arg4[%c2, %c0_116] : memref<7x256xf32, #tpu.memory_space<vmem>>, vector<1x256xf32>
    %cst_117 = arith.constant 0.000000e+00 : f32
    %202 = vector.broadcast %cst_117 : f32 to vector<1x1x256xf32>
    %c2_118 = arith.constant 2 : index
    %203 = memref.load %arg1[%c2_118] : memref<98xf32, #tpu.memory_space<smem>>
    %c51_119 = arith.constant 51 : index
    %204 = memref.load %arg1[%c51_119] : memref<98xf32, #tpu.memory_space<smem>>
    %c0_120 = arith.constant 0 : index
    %c0_121 = arith.constant 0 : index
    %c2_122 = arith.constant 2 : index
    %205 = vector.load %arg7[%c0_120, %c0_121, %c2_122] : memref<1x1x358xf32, #tpu.memory_space<vmem>>, vector<1x1x256xf32>
    %206 = vector.broadcast %203 : f32 to vector<1x1x256xf32>
    %207 = arith.mulf %206, %205 : vector<1x1x256xf32>
    %208 = arith.addf %202, %207 : vector<1x1x256xf32>
    %c0_123 = arith.constant 0 : index
    %c0_124 = arith.constant 0 : index
    %c2_125 = arith.constant 2 : index
    %209 = vector.load %arg8[%c0_123, %c0_124, %c2_125] : memref<1x1x358xf32, #tpu.memory_space<vmem>>, vector<1x1x256xf32>
    %210 = vector.broadcast %204 : f32 to vector<1x1x256xf32>
    %211 = arith.mulf %210, %209 : vector<1x1x256xf32>
    %212 = arith.addf %208, %211 : vector<1x1x256xf32>
    %c9 = arith.constant 9 : index
    %213 = memref.load %arg1[%c9] : memref<98xf32, #tpu.memory_space<smem>>
    %c58 = arith.constant 58 : index
    %214 = memref.load %arg1[%c58] : memref<98xf32, #tpu.memory_space<smem>>
    %c0_126 = arith.constant 0 : index
    %c0_127 = arith.constant 0 : index
    %c18 = arith.constant 18 : index
    %215 = vector.load %arg7[%c0_126, %c0_127, %c18] : memref<1x1x358xf32, #tpu.memory_space<vmem>>, vector<1x1x256xf32>
    %216 = vector.broadcast %213 : f32 to vector<1x1x256xf32>
    %217 = arith.mulf %216, %215 : vector<1x1x256xf32>
    %218 = arith.addf %212, %217 : vector<1x1x256xf32>
    %c0_128 = arith.constant 0 : index
    %c0_129 = arith.constant 0 : index
    %c18_130 = arith.constant 18 : index
    %219 = vector.load %arg8[%c0_128, %c0_129, %c18_130] : memref<1x1x358xf32, #tpu.memory_space<vmem>>, vector<1x1x256xf32>
    %220 = vector.broadcast %214 : f32 to vector<1x1x256xf32>
    %221 = arith.mulf %220, %219 : vector<1x1x256xf32>
    %222 = arith.addf %218, %221 : vector<1x1x256xf32>
    %c16_131 = arith.constant 16 : index
    %223 = memref.load %arg1[%c16_131] : memref<98xf32, #tpu.memory_space<smem>>
    %c65_132 = arith.constant 65 : index
    %224 = memref.load %arg1[%c65_132] : memref<98xf32, #tpu.memory_space<smem>>
    %c0_133 = arith.constant 0 : index
    %c0_134 = arith.constant 0 : index
    %c34 = arith.constant 34 : index
    %225 = vector.load %arg7[%c0_133, %c0_134, %c34] : memref<1x1x358xf32, #tpu.memory_space<vmem>>, vector<1x1x256xf32>
    %226 = vector.broadcast %223 : f32 to vector<1x1x256xf32>
    %227 = arith.mulf %226, %225 : vector<1x1x256xf32>
    %228 = arith.addf %222, %227 : vector<1x1x256xf32>
    %c0_135 = arith.constant 0 : index
    %c0_136 = arith.constant 0 : index
    %c34_137 = arith.constant 34 : index
    %229 = vector.load %arg8[%c0_135, %c0_136, %c34_137] : memref<1x1x358xf32, #tpu.memory_space<vmem>>, vector<1x1x256xf32>
    %230 = vector.broadcast %224 : f32 to vector<1x1x256xf32>
    %231 = arith.mulf %230, %229 : vector<1x1x256xf32>
    %232 = arith.addf %228, %231 : vector<1x1x256xf32>
    %c23 = arith.constant 23 : index
    %233 = memref.load %arg1[%c23] : memref<98xf32, #tpu.memory_space<smem>>
    %c72 = arith.constant 72 : index
    %234 = memref.load %arg1[%c72] : memref<98xf32, #tpu.memory_space<smem>>
    %c0_138 = arith.constant 0 : index
    %c0_139 = arith.constant 0 : index
    %c50_140 = arith.constant 50 : index
    %235 = vector.load %arg7[%c0_138, %c0_139, %c50_140] : memref<1x1x358xf32, #tpu.memory_space<vmem>>, vector<1x1x256xf32>
    %236 = vector.broadcast %233 : f32 to vector<1x1x256xf32>
    %237 = arith.mulf %236, %235 : vector<1x1x256xf32>
    %238 = arith.addf %232, %237 : vector<1x1x256xf32>
    %c0_141 = arith.constant 0 : index
    %c0_142 = arith.constant 0 : index
    %c50_143 = arith.constant 50 : index
    %239 = vector.load %arg8[%c0_141, %c0_142, %c50_143] : memref<1x1x358xf32, #tpu.memory_space<vmem>>, vector<1x1x256xf32>
    %240 = vector.broadcast %234 : f32 to vector<1x1x256xf32>
    %241 = arith.mulf %240, %239 : vector<1x1x256xf32>
    %242 = arith.addf %238, %241 : vector<1x1x256xf32>
    %c30 = arith.constant 30 : index
    %243 = memref.load %arg1[%c30] : memref<98xf32, #tpu.memory_space<smem>>
    %c79 = arith.constant 79 : index
    %244 = memref.load %arg1[%c79] : memref<98xf32, #tpu.memory_space<smem>>
    %c0_144 = arith.constant 0 : index
    %c0_145 = arith.constant 0 : index
    %c66 = arith.constant 66 : index
    %245 = vector.load %arg7[%c0_144, %c0_145, %c66] : memref<1x1x358xf32, #tpu.memory_space<vmem>>, vector<1x1x256xf32>
    %246 = vector.broadcast %243 : f32 to vector<1x1x256xf32>
    %247 = arith.mulf %246, %245 : vector<1x1x256xf32>
    %248 = arith.addf %242, %247 : vector<1x1x256xf32>
    %c0_146 = arith.constant 0 : index
    %c0_147 = arith.constant 0 : index
    %c66_148 = arith.constant 66 : index
    %249 = vector.load %arg8[%c0_146, %c0_147, %c66_148] : memref<1x1x358xf32, #tpu.memory_space<vmem>>, vector<1x1x256xf32>
    %250 = vector.broadcast %244 : f32 to vector<1x1x256xf32>
    %251 = arith.mulf %250, %249 : vector<1x1x256xf32>
    %252 = arith.addf %248, %251 : vector<1x1x256xf32>
    %c37 = arith.constant 37 : index
    %253 = memref.load %arg1[%c37] : memref<98xf32, #tpu.memory_space<smem>>
    %c86 = arith.constant 86 : index
    %254 = memref.load %arg1[%c86] : memref<98xf32, #tpu.memory_space<smem>>
    %c0_149 = arith.constant 0 : index
    %c0_150 = arith.constant 0 : index
    %c82 = arith.constant 82 : index
    %255 = vector.load %arg7[%c0_149, %c0_150, %c82] : memref<1x1x358xf32, #tpu.memory_space<vmem>>, vector<1x1x256xf32>
    %256 = vector.broadcast %253 : f32 to vector<1x1x256xf32>
    %257 = arith.mulf %256, %255 : vector<1x1x256xf32>
    %258 = arith.addf %252, %257 : vector<1x1x256xf32>
    %c0_151 = arith.constant 0 : index
    %c0_152 = arith.constant 0 : index
    %c82_153 = arith.constant 82 : index
    %259 = vector.load %arg8[%c0_151, %c0_152, %c82_153] : memref<1x1x358xf32, #tpu.memory_space<vmem>>, vector<1x1x256xf32>
    %260 = vector.broadcast %254 : f32 to vector<1x1x256xf32>
    %261 = arith.mulf %260, %259 : vector<1x1x256xf32>
    %262 = arith.addf %258, %261 : vector<1x1x256xf32>
    %c44 = arith.constant 44 : index
    %263 = memref.load %arg1[%c44] : memref<98xf32, #tpu.memory_space<smem>>
    %c93 = arith.constant 93 : index
    %264 = memref.load %arg1[%c93] : memref<98xf32, #tpu.memory_space<smem>>
    %c0_154 = arith.constant 0 : index
    %c0_155 = arith.constant 0 : index
    %c98 = arith.constant 98 : index
    %265 = vector.load %arg7[%c0_154, %c0_155, %c98] : memref<1x1x358xf32, #tpu.memory_space<vmem>>, vector<1x1x256xf32>
    %266 = vector.broadcast %263 : f32 to vector<1x1x256xf32>
    %267 = arith.mulf %266, %265 : vector<1x1x256xf32>
    %268 = arith.addf %262, %267 : vector<1x1x256xf32>
    %c0_156 = arith.constant 0 : index
    %c0_157 = arith.constant 0 : index
    %c98_158 = arith.constant 98 : index
    %269 = vector.load %arg8[%c0_156, %c0_157, %c98_158] : memref<1x1x358xf32, #tpu.memory_space<vmem>>, vector<1x1x256xf32>
    %270 = vector.broadcast %264 : f32 to vector<1x1x256xf32>
    %271 = arith.mulf %270, %269 : vector<1x1x256xf32>
    %272 = arith.addf %268, %271 : vector<1x1x256xf32>
    %273 = vector.shape_cast %201 : vector<1x256xf32> to vector<1x1x256xf32>
    %274 = arith.mulf %273, %272 : vector<1x1x256xf32>
    %275 = arith.addf %200, %274 : vector<1x1x256xf32>
    %c3 = arith.constant 3 : index
    %c0_159 = arith.constant 0 : index
    %276 = vector.load %arg4[%c3, %c0_159] : memref<7x256xf32, #tpu.memory_space<vmem>>, vector<1x256xf32>
    %cst_160 = arith.constant 0.000000e+00 : f32
    %277 = vector.broadcast %cst_160 : f32 to vector<1x1x256xf32>
    %c3_161 = arith.constant 3 : index
    %278 = memref.load %arg1[%c3_161] : memref<98xf32, #tpu.memory_space<smem>>
    %c52 = arith.constant 52 : index
    %279 = memref.load %arg1[%c52] : memref<98xf32, #tpu.memory_space<smem>>
    %c0_162 = arith.constant 0 : index
    %c0_163 = arith.constant 0 : index
    %c3_164 = arith.constant 3 : index
    %280 = vector.load %arg7[%c0_162, %c0_163, %c3_164] : memref<1x1x358xf32, #tpu.memory_space<vmem>>, vector<1x1x256xf32>
    %281 = vector.broadcast %278 : f32 to vector<1x1x256xf32>
    %282 = arith.mulf %281, %280 : vector<1x1x256xf32>
    %283 = arith.addf %277, %282 : vector<1x1x256xf32>
    %c0_165 = arith.constant 0 : index
    %c0_166 = arith.constant 0 : index
    %c3_167 = arith.constant 3 : index
    %284 = vector.load %arg8[%c0_165, %c0_166, %c3_167] : memref<1x1x358xf32, #tpu.memory_space<vmem>>, vector<1x1x256xf32>
    %285 = vector.broadcast %279 : f32 to vector<1x1x256xf32>
    %286 = arith.mulf %285, %284 : vector<1x1x256xf32>
    %287 = arith.addf %283, %286 : vector<1x1x256xf32>
    %c10 = arith.constant 10 : index
    %288 = memref.load %arg1[%c10] : memref<98xf32, #tpu.memory_space<smem>>
    %c59 = arith.constant 59 : index
    %289 = memref.load %arg1[%c59] : memref<98xf32, #tpu.memory_space<smem>>
    %c0_168 = arith.constant 0 : index
    %c0_169 = arith.constant 0 : index
    %c19 = arith.constant 19 : index
    %290 = vector.load %arg7[%c0_168, %c0_169, %c19] : memref<1x1x358xf32, #tpu.memory_space<vmem>>, vector<1x1x256xf32>
    %291 = vector.broadcast %288 : f32 to vector<1x1x256xf32>
    %292 = arith.mulf %291, %290 : vector<1x1x256xf32>
    %293 = arith.addf %287, %292 : vector<1x1x256xf32>
    %c0_170 = arith.constant 0 : index
    %c0_171 = arith.constant 0 : index
    %c19_172 = arith.constant 19 : index
    %294 = vector.load %arg8[%c0_170, %c0_171, %c19_172] : memref<1x1x358xf32, #tpu.memory_space<vmem>>, vector<1x1x256xf32>
    %295 = vector.broadcast %289 : f32 to vector<1x1x256xf32>
    %296 = arith.mulf %295, %294 : vector<1x1x256xf32>
    %297 = arith.addf %293, %296 : vector<1x1x256xf32>
    %c17_173 = arith.constant 17 : index
    %298 = memref.load %arg1[%c17_173] : memref<98xf32, #tpu.memory_space<smem>>
    %c66_174 = arith.constant 66 : index
    %299 = memref.load %arg1[%c66_174] : memref<98xf32, #tpu.memory_space<smem>>
    %c0_175 = arith.constant 0 : index
    %c0_176 = arith.constant 0 : index
    %c35_177 = arith.constant 35 : index
    %300 = vector.load %arg7[%c0_175, %c0_176, %c35_177] : memref<1x1x358xf32, #tpu.memory_space<vmem>>, vector<1x1x256xf32>
    %301 = vector.broadcast %298 : f32 to vector<1x1x256xf32>
    %302 = arith.mulf %301, %300 : vector<1x1x256xf32>
    %303 = arith.addf %297, %302 : vector<1x1x256xf32>
    %c0_178 = arith.constant 0 : index
    %c0_179 = arith.constant 0 : index
    %c35_180 = arith.constant 35 : index
    %304 = vector.load %arg8[%c0_178, %c0_179, %c35_180] : memref<1x1x358xf32, #tpu.memory_space<vmem>>, vector<1x1x256xf32>
    %305 = vector.broadcast %299 : f32 to vector<1x1x256xf32>
    %306 = arith.mulf %305, %304 : vector<1x1x256xf32>
    %307 = arith.addf %303, %306 : vector<1x1x256xf32>
    %c24 = arith.constant 24 : index
    %308 = memref.load %arg1[%c24] : memref<98xf32, #tpu.memory_space<smem>>
    %c73 = arith.constant 73 : index
    %309 = memref.load %arg1[%c73] : memref<98xf32, #tpu.memory_space<smem>>
    %c0_181 = arith.constant 0 : index
    %c0_182 = arith.constant 0 : index
    %c51_183 = arith.constant 51 : index
    %310 = vector.load %arg7[%c0_181, %c0_182, %c51_183] : memref<1x1x358xf32, #tpu.memory_space<vmem>>, vector<1x1x256xf32>
    %311 = vector.broadcast %308 : f32 to vector<1x1x256xf32>
    %312 = arith.mulf %311, %310 : vector<1x1x256xf32>
    %313 = arith.addf %307, %312 : vector<1x1x256xf32>
    %c0_184 = arith.constant 0 : index
    %c0_185 = arith.constant 0 : index
    %c51_186 = arith.constant 51 : index
    %314 = vector.load %arg8[%c0_184, %c0_185, %c51_186] : memref<1x1x358xf32, #tpu.memory_space<vmem>>, vector<1x1x256xf32>
    %315 = vector.broadcast %309 : f32 to vector<1x1x256xf32>
    %316 = arith.mulf %315, %314 : vector<1x1x256xf32>
    %317 = arith.addf %313, %316 : vector<1x1x256xf32>
    %c31 = arith.constant 31 : index
    %318 = memref.load %arg1[%c31] : memref<98xf32, #tpu.memory_space<smem>>
    %c80_187 = arith.constant 80 : index
    %319 = memref.load %arg1[%c80_187] : memref<98xf32, #tpu.memory_space<smem>>
    %c0_188 = arith.constant 0 : index
    %c0_189 = arith.constant 0 : index
    %c67 = arith.constant 67 : index
    %320 = vector.load %arg7[%c0_188, %c0_189, %c67] : memref<1x1x358xf32, #tpu.memory_space<vmem>>, vector<1x1x256xf32>
    %321 = vector.broadcast %318 : f32 to vector<1x1x256xf32>
    %322 = arith.mulf %321, %320 : vector<1x1x256xf32>
    %323 = arith.addf %317, %322 : vector<1x1x256xf32>
    %c0_190 = arith.constant 0 : index
    %c0_191 = arith.constant 0 : index
    %c67_192 = arith.constant 67 : index
    %324 = vector.load %arg8[%c0_190, %c0_191, %c67_192] : memref<1x1x358xf32, #tpu.memory_space<vmem>>, vector<1x1x256xf32>
    %325 = vector.broadcast %319 : f32 to vector<1x1x256xf32>
    %326 = arith.mulf %325, %324 : vector<1x1x256xf32>
    %327 = arith.addf %323, %326 : vector<1x1x256xf32>
    %c38 = arith.constant 38 : index
    %328 = memref.load %arg1[%c38] : memref<98xf32, #tpu.memory_space<smem>>
    %c87 = arith.constant 87 : index
    %329 = memref.load %arg1[%c87] : memref<98xf32, #tpu.memory_space<smem>>
    %c0_193 = arith.constant 0 : index
    %c0_194 = arith.constant 0 : index
    %c83 = arith.constant 83 : index
    %330 = vector.load %arg7[%c0_193, %c0_194, %c83] : memref<1x1x358xf32, #tpu.memory_space<vmem>>, vector<1x1x256xf32>
    %331 = vector.broadcast %328 : f32 to vector<1x1x256xf32>
    %332 = arith.mulf %331, %330 : vector<1x1x256xf32>
    %333 = arith.addf %327, %332 : vector<1x1x256xf32>
    %c0_195 = arith.constant 0 : index
    %c0_196 = arith.constant 0 : index
    %c83_197 = arith.constant 83 : index
    %334 = vector.load %arg8[%c0_195, %c0_196, %c83_197] : memref<1x1x358xf32, #tpu.memory_space<vmem>>, vector<1x1x256xf32>
    %335 = vector.broadcast %329 : f32 to vector<1x1x256xf32>
    %336 = arith.mulf %335, %334 : vector<1x1x256xf32>
    %337 = arith.addf %333, %336 : vector<1x1x256xf32>
    %c45 = arith.constant 45 : index
    %338 = memref.load %arg1[%c45] : memref<98xf32, #tpu.memory_space<smem>>
    %c94 = arith.constant 94 : index
    %339 = memref.load %arg1[%c94] : memref<98xf32, #tpu.memory_space<smem>>
    %c0_198 = arith.constant 0 : index
    %c0_199 = arith.constant 0 : index
    %c99 = arith.constant 99 : index
    %340 = vector.load %arg7[%c0_198, %c0_199, %c99] : memref<1x1x358xf32, #tpu.memory_space<vmem>>, vector<1x1x256xf32>
    %341 = vector.broadcast %338 : f32 to vector<1x1x256xf32>
    %342 = arith.mulf %341, %340 : vector<1x1x256xf32>
    %343 = arith.addf %337, %342 : vector<1x1x256xf32>
    %c0_200 = arith.constant 0 : index
    %c0_201 = arith.constant 0 : index
    %c99_202 = arith.constant 99 : index
    %344 = vector.load %arg8[%c0_200, %c0_201, %c99_202] : memref<1x1x358xf32, #tpu.memory_space<vmem>>, vector<1x1x256xf32>
    %345 = vector.broadcast %339 : f32 to vector<1x1x256xf32>
    %346 = arith.mulf %345, %344 : vector<1x1x256xf32>
    %347 = arith.addf %343, %346 : vector<1x1x256xf32>
    %348 = vector.shape_cast %276 : vector<1x256xf32> to vector<1x1x256xf32>
    %349 = arith.mulf %348, %347 : vector<1x1x256xf32>
    %350 = arith.addf %275, %349 : vector<1x1x256xf32>
    %c4 = arith.constant 4 : index
    %c0_203 = arith.constant 0 : index
    %351 = vector.load %arg4[%c4, %c0_203] : memref<7x256xf32, #tpu.memory_space<vmem>>, vector<1x256xf32>
    %cst_204 = arith.constant 0.000000e+00 : f32
    %352 = vector.broadcast %cst_204 : f32 to vector<1x1x256xf32>
    %c4_205 = arith.constant 4 : index
    %353 = memref.load %arg1[%c4_205] : memref<98xf32, #tpu.memory_space<smem>>
    %c53 = arith.constant 53 : index
    %354 = memref.load %arg1[%c53] : memref<98xf32, #tpu.memory_space<smem>>
    %c0_206 = arith.constant 0 : index
    %c0_207 = arith.constant 0 : index
    %c4_208 = arith.constant 4 : index
    %355 = vector.load %arg7[%c0_206, %c0_207, %c4_208] : memref<1x1x358xf32, #tpu.memory_space<vmem>>, vector<1x1x256xf32>
    %356 = vector.broadcast %353 : f32 to vector<1x1x256xf32>
    %357 = arith.mulf %356, %355 : vector<1x1x256xf32>
    %358 = arith.addf %352, %357 : vector<1x1x256xf32>
    %c0_209 = arith.constant 0 : index
    %c0_210 = arith.constant 0 : index
    %c4_211 = arith.constant 4 : index
    %359 = vector.load %arg8[%c0_209, %c0_210, %c4_211] : memref<1x1x358xf32, #tpu.memory_space<vmem>>, vector<1x1x256xf32>
    %360 = vector.broadcast %354 : f32 to vector<1x1x256xf32>
    %361 = arith.mulf %360, %359 : vector<1x1x256xf32>
    %362 = arith.addf %358, %361 : vector<1x1x256xf32>
    %c11 = arith.constant 11 : index
    %363 = memref.load %arg1[%c11] : memref<98xf32, #tpu.memory_space<smem>>
    %c60 = arith.constant 60 : index
    %364 = memref.load %arg1[%c60] : memref<98xf32, #tpu.memory_space<smem>>
    %c0_212 = arith.constant 0 : index
    %c0_213 = arith.constant 0 : index
    %c20 = arith.constant 20 : index
    %365 = vector.load %arg7[%c0_212, %c0_213, %c20] : memref<1x1x358xf32, #tpu.memory_space<vmem>>, vector<1x1x256xf32>
    %366 = vector.broadcast %363 : f32 to vector<1x1x256xf32>
    %367 = arith.mulf %366, %365 : vector<1x1x256xf32>
    %368 = arith.addf %362, %367 : vector<1x1x256xf32>
    %c0_214 = arith.constant 0 : index
    %c0_215 = arith.constant 0 : index
    %c20_216 = arith.constant 20 : index
    %369 = vector.load %arg8[%c0_214, %c0_215, %c20_216] : memref<1x1x358xf32, #tpu.memory_space<vmem>>, vector<1x1x256xf32>
    %370 = vector.broadcast %364 : f32 to vector<1x1x256xf32>
    %371 = arith.mulf %370, %369 : vector<1x1x256xf32>
    %372 = arith.addf %368, %371 : vector<1x1x256xf32>
    %c18_217 = arith.constant 18 : index
    %373 = memref.load %arg1[%c18_217] : memref<98xf32, #tpu.memory_space<smem>>
    %c67_218 = arith.constant 67 : index
    %374 = memref.load %arg1[%c67_218] : memref<98xf32, #tpu.memory_space<smem>>
    %c0_219 = arith.constant 0 : index
    %c0_220 = arith.constant 0 : index
    %c36_221 = arith.constant 36 : index
    %375 = vector.load %arg7[%c0_219, %c0_220, %c36_221] : memref<1x1x358xf32, #tpu.memory_space<vmem>>, vector<1x1x256xf32>
    %376 = vector.broadcast %373 : f32 to vector<1x1x256xf32>
    %377 = arith.mulf %376, %375 : vector<1x1x256xf32>
    %378 = arith.addf %372, %377 : vector<1x1x256xf32>
    %c0_222 = arith.constant 0 : index
    %c0_223 = arith.constant 0 : index
    %c36_224 = arith.constant 36 : index
    %379 = vector.load %arg8[%c0_222, %c0_223, %c36_224] : memref<1x1x358xf32, #tpu.memory_space<vmem>>, vector<1x1x256xf32>
    %380 = vector.broadcast %374 : f32 to vector<1x1x256xf32>
    %381 = arith.mulf %380, %379 : vector<1x1x256xf32>
    %382 = arith.addf %378, %381 : vector<1x1x256xf32>
    %c25 = arith.constant 25 : index
    %383 = memref.load %arg1[%c25] : memref<98xf32, #tpu.memory_space<smem>>
    %c74 = arith.constant 74 : index
    %384 = memref.load %arg1[%c74] : memref<98xf32, #tpu.memory_space<smem>>
    %c0_225 = arith.constant 0 : index
    %c0_226 = arith.constant 0 : index
    %c52_227 = arith.constant 52 : index
    %385 = vector.load %arg7[%c0_225, %c0_226, %c52_227] : memref<1x1x358xf32, #tpu.memory_space<vmem>>, vector<1x1x256xf32>
    %386 = vector.broadcast %383 : f32 to vector<1x1x256xf32>
    %387 = arith.mulf %386, %385 : vector<1x1x256xf32>
    %388 = arith.addf %382, %387 : vector<1x1x256xf32>
    %c0_228 = arith.constant 0 : index
    %c0_229 = arith.constant 0 : index
    %c52_230 = arith.constant 52 : index
    %389 = vector.load %arg8[%c0_228, %c0_229, %c52_230] : memref<1x1x358xf32, #tpu.memory_space<vmem>>, vector<1x1x256xf32>
    %390 = vector.broadcast %384 : f32 to vector<1x1x256xf32>
    %391 = arith.mulf %390, %389 : vector<1x1x256xf32>
    %392 = arith.addf %388, %391 : vector<1x1x256xf32>
    %c32_231 = arith.constant 32 : index
    %393 = memref.load %arg1[%c32_231] : memref<98xf32, #tpu.memory_space<smem>>
    %c81_232 = arith.constant 81 : index
    %394 = memref.load %arg1[%c81_232] : memref<98xf32, #tpu.memory_space<smem>>
    %c0_233 = arith.constant 0 : index
    %c0_234 = arith.constant 0 : index
    %c68 = arith.constant 68 : index
    %395 = vector.load %arg7[%c0_233, %c0_234, %c68] : memref<1x1x358xf32, #tpu.memory_space<vmem>>, vector<1x1x256xf32>
    %396 = vector.broadcast %393 : f32 to vector<1x1x256xf32>
    %397 = arith.mulf %396, %395 : vector<1x1x256xf32>
    %398 = arith.addf %392, %397 : vector<1x1x256xf32>
    %c0_235 = arith.constant 0 : index
    %c0_236 = arith.constant 0 : index
    %c68_237 = arith.constant 68 : index
    %399 = vector.load %arg8[%c0_235, %c0_236, %c68_237] : memref<1x1x358xf32, #tpu.memory_space<vmem>>, vector<1x1x256xf32>
    %400 = vector.broadcast %394 : f32 to vector<1x1x256xf32>
    %401 = arith.mulf %400, %399 : vector<1x1x256xf32>
    %402 = arith.addf %398, %401 : vector<1x1x256xf32>
    %c39 = arith.constant 39 : index
    %403 = memref.load %arg1[%c39] : memref<98xf32, #tpu.memory_space<smem>>
    %c88 = arith.constant 88 : index
    %404 = memref.load %arg1[%c88] : memref<98xf32, #tpu.memory_space<smem>>
    %c0_238 = arith.constant 0 : index
    %c0_239 = arith.constant 0 : index
    %c84_240 = arith.constant 84 : index
    %405 = vector.load %arg7[%c0_238, %c0_239, %c84_240] : memref<1x1x358xf32, #tpu.memory_space<vmem>>, vector<1x1x256xf32>
    %406 = vector.broadcast %403 : f32 to vector<1x1x256xf32>
    %407 = arith.mulf %406, %405 : vector<1x1x256xf32>
    %408 = arith.addf %402, %407 : vector<1x1x256xf32>
    %c0_241 = arith.constant 0 : index
    %c0_242 = arith.constant 0 : index
    %c84_243 = arith.constant 84 : index
    %409 = vector.load %arg8[%c0_241, %c0_242, %c84_243] : memref<1x1x358xf32, #tpu.memory_space<vmem>>, vector<1x1x256xf32>
    %410 = vector.broadcast %404 : f32 to vector<1x1x256xf32>
    %411 = arith.mulf %410, %409 : vector<1x1x256xf32>
    %412 = arith.addf %408, %411 : vector<1x1x256xf32>
    %c46 = arith.constant 46 : index
    %413 = memref.load %arg1[%c46] : memref<98xf32, #tpu.memory_space<smem>>
    %c95 = arith.constant 95 : index
    %414 = memref.load %arg1[%c95] : memref<98xf32, #tpu.memory_space<smem>>
    %c0_244 = arith.constant 0 : index
    %c0_245 = arith.constant 0 : index
    %c100 = arith.constant 100 : index
    %415 = vector.load %arg7[%c0_244, %c0_245, %c100] : memref<1x1x358xf32, #tpu.memory_space<vmem>>, vector<1x1x256xf32>
    %416 = vector.broadcast %413 : f32 to vector<1x1x256xf32>
    %417 = arith.mulf %416, %415 : vector<1x1x256xf32>
    %418 = arith.addf %412, %417 : vector<1x1x256xf32>
    %c0_246 = arith.constant 0 : index
    %c0_247 = arith.constant 0 : index
    %c100_248 = arith.constant 100 : index
    %419 = vector.load %arg8[%c0_246, %c0_247, %c100_248] : memref<1x1x358xf32, #tpu.memory_space<vmem>>, vector<1x1x256xf32>
    %420 = vector.broadcast %414 : f32 to vector<1x1x256xf32>
    %421 = arith.mulf %420, %419 : vector<1x1x256xf32>
    %422 = arith.addf %418, %421 : vector<1x1x256xf32>
    %423 = vector.shape_cast %351 : vector<1x256xf32> to vector<1x1x256xf32>
    %424 = arith.mulf %423, %422 : vector<1x1x256xf32>
    %425 = arith.addf %350, %424 : vector<1x1x256xf32>
    %c5 = arith.constant 5 : index
    %c0_249 = arith.constant 0 : index
    %426 = vector.load %arg4[%c5, %c0_249] : memref<7x256xf32, #tpu.memory_space<vmem>>, vector<1x256xf32>
    %cst_250 = arith.constant 0.000000e+00 : f32
    %427 = vector.broadcast %cst_250 : f32 to vector<1x1x256xf32>
    %c5_251 = arith.constant 5 : index
    %428 = memref.load %arg1[%c5_251] : memref<98xf32, #tpu.memory_space<smem>>
    %c54 = arith.constant 54 : index
    %429 = memref.load %arg1[%c54] : memref<98xf32, #tpu.memory_space<smem>>
    %c0_252 = arith.constant 0 : index
    %c0_253 = arith.constant 0 : index
    %c5_254 = arith.constant 5 : index
    %430 = vector.load %arg7[%c0_252, %c0_253, %c5_254] : memref<1x1x358xf32, #tpu.memory_space<vmem>>, vector<1x1x256xf32>
    %431 = vector.broadcast %428 : f32 to vector<1x1x256xf32>
    %432 = arith.mulf %431, %430 : vector<1x1x256xf32>
    %433 = arith.addf %427, %432 : vector<1x1x256xf32>
    %c0_255 = arith.constant 0 : index
    %c0_256 = arith.constant 0 : index
    %c5_257 = arith.constant 5 : index
    %434 = vector.load %arg8[%c0_255, %c0_256, %c5_257] : memref<1x1x358xf32, #tpu.memory_space<vmem>>, vector<1x1x256xf32>
    %435 = vector.broadcast %429 : f32 to vector<1x1x256xf32>
    %436 = arith.mulf %435, %434 : vector<1x1x256xf32>
    %437 = arith.addf %433, %436 : vector<1x1x256xf32>
    %c12 = arith.constant 12 : index
    %438 = memref.load %arg1[%c12] : memref<98xf32, #tpu.memory_space<smem>>
    %c61 = arith.constant 61 : index
    %439 = memref.load %arg1[%c61] : memref<98xf32, #tpu.memory_space<smem>>
    %c0_258 = arith.constant 0 : index
    %c0_259 = arith.constant 0 : index
    %c21_260 = arith.constant 21 : index
    %440 = vector.load %arg7[%c0_258, %c0_259, %c21_260] : memref<1x1x358xf32, #tpu.memory_space<vmem>>, vector<1x1x256xf32>
    %441 = vector.broadcast %438 : f32 to vector<1x1x256xf32>
    %442 = arith.mulf %441, %440 : vector<1x1x256xf32>
    %443 = arith.addf %437, %442 : vector<1x1x256xf32>
    %c0_261 = arith.constant 0 : index
    %c0_262 = arith.constant 0 : index
    %c21_263 = arith.constant 21 : index
    %444 = vector.load %arg8[%c0_261, %c0_262, %c21_263] : memref<1x1x358xf32, #tpu.memory_space<vmem>>, vector<1x1x256xf32>
    %445 = vector.broadcast %439 : f32 to vector<1x1x256xf32>
    %446 = arith.mulf %445, %444 : vector<1x1x256xf32>
    %447 = arith.addf %443, %446 : vector<1x1x256xf32>
    %c19_264 = arith.constant 19 : index
    %448 = memref.load %arg1[%c19_264] : memref<98xf32, #tpu.memory_space<smem>>
    %c68_265 = arith.constant 68 : index
    %449 = memref.load %arg1[%c68_265] : memref<98xf32, #tpu.memory_space<smem>>
    %c0_266 = arith.constant 0 : index
    %c0_267 = arith.constant 0 : index
    %c37_268 = arith.constant 37 : index
    %450 = vector.load %arg7[%c0_266, %c0_267, %c37_268] : memref<1x1x358xf32, #tpu.memory_space<vmem>>, vector<1x1x256xf32>
    %451 = vector.broadcast %448 : f32 to vector<1x1x256xf32>
    %452 = arith.mulf %451, %450 : vector<1x1x256xf32>
    %453 = arith.addf %447, %452 : vector<1x1x256xf32>
    %c0_269 = arith.constant 0 : index
    %c0_270 = arith.constant 0 : index
    %c37_271 = arith.constant 37 : index
    %454 = vector.load %arg8[%c0_269, %c0_270, %c37_271] : memref<1x1x358xf32, #tpu.memory_space<vmem>>, vector<1x1x256xf32>
    %455 = vector.broadcast %449 : f32 to vector<1x1x256xf32>
    %456 = arith.mulf %455, %454 : vector<1x1x256xf32>
    %457 = arith.addf %453, %456 : vector<1x1x256xf32>
    %c26 = arith.constant 26 : index
    %458 = memref.load %arg1[%c26] : memref<98xf32, #tpu.memory_space<smem>>
    %c75 = arith.constant 75 : index
    %459 = memref.load %arg1[%c75] : memref<98xf32, #tpu.memory_space<smem>>
    %c0_272 = arith.constant 0 : index
    %c0_273 = arith.constant 0 : index
    %c53_274 = arith.constant 53 : index
    %460 = vector.load %arg7[%c0_272, %c0_273, %c53_274] : memref<1x1x358xf32, #tpu.memory_space<vmem>>, vector<1x1x256xf32>
    %461 = vector.broadcast %458 : f32 to vector<1x1x256xf32>
    %462 = arith.mulf %461, %460 : vector<1x1x256xf32>
    %463 = arith.addf %457, %462 : vector<1x1x256xf32>
    %c0_275 = arith.constant 0 : index
    %c0_276 = arith.constant 0 : index
    %c53_277 = arith.constant 53 : index
    %464 = vector.load %arg8[%c0_275, %c0_276, %c53_277] : memref<1x1x358xf32, #tpu.memory_space<vmem>>, vector<1x1x256xf32>
    %465 = vector.broadcast %459 : f32 to vector<1x1x256xf32>
    %466 = arith.mulf %465, %464 : vector<1x1x256xf32>
    %467 = arith.addf %463, %466 : vector<1x1x256xf32>
    %c33_278 = arith.constant 33 : index
    %468 = memref.load %arg1[%c33_278] : memref<98xf32, #tpu.memory_space<smem>>
    %c82_279 = arith.constant 82 : index
    %469 = memref.load %arg1[%c82_279] : memref<98xf32, #tpu.memory_space<smem>>
    %c0_280 = arith.constant 0 : index
    %c0_281 = arith.constant 0 : index
    %c69 = arith.constant 69 : index
    %470 = vector.load %arg7[%c0_280, %c0_281, %c69] : memref<1x1x358xf32, #tpu.memory_space<vmem>>, vector<1x1x256xf32>
    %471 = vector.broadcast %468 : f32 to vector<1x1x256xf32>
    %472 = arith.mulf %471, %470 : vector<1x1x256xf32>
    %473 = arith.addf %467, %472 : vector<1x1x256xf32>
    %c0_282 = arith.constant 0 : index
    %c0_283 = arith.constant 0 : index
    %c69_284 = arith.constant 69 : index
    %474 = vector.load %arg8[%c0_282, %c0_283, %c69_284] : memref<1x1x358xf32, #tpu.memory_space<vmem>>, vector<1x1x256xf32>
    %475 = vector.broadcast %469 : f32 to vector<1x1x256xf32>
    %476 = arith.mulf %475, %474 : vector<1x1x256xf32>
    %477 = arith.addf %473, %476 : vector<1x1x256xf32>
    %c40 = arith.constant 40 : index
    %478 = memref.load %arg1[%c40] : memref<98xf32, #tpu.memory_space<smem>>
    %c89 = arith.constant 89 : index
    %479 = memref.load %arg1[%c89] : memref<98xf32, #tpu.memory_space<smem>>
    %c0_285 = arith.constant 0 : index
    %c0_286 = arith.constant 0 : index
    %c85_287 = arith.constant 85 : index
    %480 = vector.load %arg7[%c0_285, %c0_286, %c85_287] : memref<1x1x358xf32, #tpu.memory_space<vmem>>, vector<1x1x256xf32>
    %481 = vector.broadcast %478 : f32 to vector<1x1x256xf32>
    %482 = arith.mulf %481, %480 : vector<1x1x256xf32>
    %483 = arith.addf %477, %482 : vector<1x1x256xf32>
    %c0_288 = arith.constant 0 : index
    %c0_289 = arith.constant 0 : index
    %c85_290 = arith.constant 85 : index
    %484 = vector.load %arg8[%c0_288, %c0_289, %c85_290] : memref<1x1x358xf32, #tpu.memory_space<vmem>>, vector<1x1x256xf32>
    %485 = vector.broadcast %479 : f32 to vector<1x1x256xf32>
    %486 = arith.mulf %485, %484 : vector<1x1x256xf32>
    %487 = arith.addf %483, %486 : vector<1x1x256xf32>
    %c47 = arith.constant 47 : index
    %488 = memref.load %arg1[%c47] : memref<98xf32, #tpu.memory_space<smem>>
    %c96_291 = arith.constant 96 : index
    %489 = memref.load %arg1[%c96_291] : memref<98xf32, #tpu.memory_space<smem>>
    %c0_292 = arith.constant 0 : index
    %c0_293 = arith.constant 0 : index
    %c101 = arith.constant 101 : index
    %490 = vector.load %arg7[%c0_292, %c0_293, %c101] : memref<1x1x358xf32, #tpu.memory_space<vmem>>, vector<1x1x256xf32>
    %491 = vector.broadcast %488 : f32 to vector<1x1x256xf32>
    %492 = arith.mulf %491, %490 : vector<1x1x256xf32>
    %493 = arith.addf %487, %492 : vector<1x1x256xf32>
    %c0_294 = arith.constant 0 : index
    %c0_295 = arith.constant 0 : index
    %c101_296 = arith.constant 101 : index
    %494 = vector.load %arg8[%c0_294, %c0_295, %c101_296] : memref<1x1x358xf32, #tpu.memory_space<vmem>>, vector<1x1x256xf32>
    %495 = vector.broadcast %489 : f32 to vector<1x1x256xf32>
    %496 = arith.mulf %495, %494 : vector<1x1x256xf32>
    %497 = arith.addf %493, %496 : vector<1x1x256xf32>
    %498 = vector.shape_cast %426 : vector<1x256xf32> to vector<1x1x256xf32>
    %499 = arith.mulf %498, %497 : vector<1x1x256xf32>
    %500 = arith.addf %425, %499 : vector<1x1x256xf32>
    %c6 = arith.constant 6 : index
    %c0_297 = arith.constant 0 : index
    %501 = vector.load %arg4[%c6, %c0_297] : memref<7x256xf32, #tpu.memory_space<vmem>>, vector<1x256xf32>
    %cst_298 = arith.constant 0.000000e+00 : f32
    %502 = vector.broadcast %cst_298 : f32 to vector<1x1x256xf32>
    %c6_299 = arith.constant 6 : index
    %503 = memref.load %arg1[%c6_299] : memref<98xf32, #tpu.memory_space<smem>>
    %c55 = arith.constant 55 : index
    %504 = memref.load %arg1[%c55] : memref<98xf32, #tpu.memory_space<smem>>
    %c0_300 = arith.constant 0 : index
    %c0_301 = arith.constant 0 : index
    %c6_302 = arith.constant 6 : index
    %505 = vector.load %arg7[%c0_300, %c0_301, %c6_302] : memref<1x1x358xf32, #tpu.memory_space<vmem>>, vector<1x1x256xf32>
    %506 = vector.broadcast %503 : f32 to vector<1x1x256xf32>
    %507 = arith.mulf %506, %505 : vector<1x1x256xf32>
    %508 = arith.addf %502, %507 : vector<1x1x256xf32>
    %c0_303 = arith.constant 0 : index
    %c0_304 = arith.constant 0 : index
    %c6_305 = arith.constant 6 : index
    %509 = vector.load %arg8[%c0_303, %c0_304, %c6_305] : memref<1x1x358xf32, #tpu.memory_space<vmem>>, vector<1x1x256xf32>
    %510 = vector.broadcast %504 : f32 to vector<1x1x256xf32>
    %511 = arith.mulf %510, %509 : vector<1x1x256xf32>
    %512 = arith.addf %508, %511 : vector<1x1x256xf32>
    %c13 = arith.constant 13 : index
    %513 = memref.load %arg1[%c13] : memref<98xf32, #tpu.memory_space<smem>>
    %c62 = arith.constant 62 : index
    %514 = memref.load %arg1[%c62] : memref<98xf32, #tpu.memory_space<smem>>
    %c0_306 = arith.constant 0 : index
    %c0_307 = arith.constant 0 : index
    %c22_308 = arith.constant 22 : index
    %515 = vector.load %arg7[%c0_306, %c0_307, %c22_308] : memref<1x1x358xf32, #tpu.memory_space<vmem>>, vector<1x1x256xf32>
    %516 = vector.broadcast %513 : f32 to vector<1x1x256xf32>
    %517 = arith.mulf %516, %515 : vector<1x1x256xf32>
    %518 = arith.addf %512, %517 : vector<1x1x256xf32>
    %c0_309 = arith.constant 0 : index
    %c0_310 = arith.constant 0 : index
    %c22_311 = arith.constant 22 : index
    %519 = vector.load %arg8[%c0_309, %c0_310, %c22_311] : memref<1x1x358xf32, #tpu.memory_space<vmem>>, vector<1x1x256xf32>
    %520 = vector.broadcast %514 : f32 to vector<1x1x256xf32>
    %521 = arith.mulf %520, %519 : vector<1x1x256xf32>
    %522 = arith.addf %518, %521 : vector<1x1x256xf32>
    %c20_312 = arith.constant 20 : index
    %523 = memref.load %arg1[%c20_312] : memref<98xf32, #tpu.memory_space<smem>>
    %c69_313 = arith.constant 69 : index
    %524 = memref.load %arg1[%c69_313] : memref<98xf32, #tpu.memory_space<smem>>
    %c0_314 = arith.constant 0 : index
    %c0_315 = arith.constant 0 : index
    %c38_316 = arith.constant 38 : index
    %525 = vector.load %arg7[%c0_314, %c0_315, %c38_316] : memref<1x1x358xf32, #tpu.memory_space<vmem>>, vector<1x1x256xf32>
    %526 = vector.broadcast %523 : f32 to vector<1x1x256xf32>
    %527 = arith.mulf %526, %525 : vector<1x1x256xf32>
    %528 = arith.addf %522, %527 : vector<1x1x256xf32>
    %c0_317 = arith.constant 0 : index
    %c0_318 = arith.constant 0 : index
    %c38_319 = arith.constant 38 : index
    %529 = vector.load %arg8[%c0_317, %c0_318, %c38_319] : memref<1x1x358xf32, #tpu.memory_space<vmem>>, vector<1x1x256xf32>
    %530 = vector.broadcast %524 : f32 to vector<1x1x256xf32>
    %531 = arith.mulf %530, %529 : vector<1x1x256xf32>
    %532 = arith.addf %528, %531 : vector<1x1x256xf32>
    %c27 = arith.constant 27 : index
    %533 = memref.load %arg1[%c27] : memref<98xf32, #tpu.memory_space<smem>>
    %c76 = arith.constant 76 : index
    %534 = memref.load %arg1[%c76] : memref<98xf32, #tpu.memory_space<smem>>
    %c0_320 = arith.constant 0 : index
    %c0_321 = arith.constant 0 : index
    %c54_322 = arith.constant 54 : index
    %535 = vector.load %arg7[%c0_320, %c0_321, %c54_322] : memref<1x1x358xf32, #tpu.memory_space<vmem>>, vector<1x1x256xf32>
    %536 = vector.broadcast %533 : f32 to vector<1x1x256xf32>
    %537 = arith.mulf %536, %535 : vector<1x1x256xf32>
    %538 = arith.addf %532, %537 : vector<1x1x256xf32>
    %c0_323 = arith.constant 0 : index
    %c0_324 = arith.constant 0 : index
    %c54_325 = arith.constant 54 : index
    %539 = vector.load %arg8[%c0_323, %c0_324, %c54_325] : memref<1x1x358xf32, #tpu.memory_space<vmem>>, vector<1x1x256xf32>
    %540 = vector.broadcast %534 : f32 to vector<1x1x256xf32>
    %541 = arith.mulf %540, %539 : vector<1x1x256xf32>
    %542 = arith.addf %538, %541 : vector<1x1x256xf32>
    %c34_326 = arith.constant 34 : index
    %543 = memref.load %arg1[%c34_326] : memref<98xf32, #tpu.memory_space<smem>>
    %c83_327 = arith.constant 83 : index
    %544 = memref.load %arg1[%c83_327] : memref<98xf32, #tpu.memory_space<smem>>
    %c0_328 = arith.constant 0 : index
    %c0_329 = arith.constant 0 : index
    %c70_330 = arith.constant 70 : index
    %545 = vector.load %arg7[%c0_328, %c0_329, %c70_330] : memref<1x1x358xf32, #tpu.memory_space<vmem>>, vector<1x1x256xf32>
    %546 = vector.broadcast %543 : f32 to vector<1x1x256xf32>
    %547 = arith.mulf %546, %545 : vector<1x1x256xf32>
    %548 = arith.addf %542, %547 : vector<1x1x256xf32>
    %c0_331 = arith.constant 0 : index
    %c0_332 = arith.constant 0 : index
    %c70_333 = arith.constant 70 : index
    %549 = vector.load %arg8[%c0_331, %c0_332, %c70_333] : memref<1x1x358xf32, #tpu.memory_space<vmem>>, vector<1x1x256xf32>
    %550 = vector.broadcast %544 : f32 to vector<1x1x256xf32>
    %551 = arith.mulf %550, %549 : vector<1x1x256xf32>
    %552 = arith.addf %548, %551 : vector<1x1x256xf32>
    %c41 = arith.constant 41 : index
    %553 = memref.load %arg1[%c41] : memref<98xf32, #tpu.memory_space<smem>>
    %c90 = arith.constant 90 : index
    %554 = memref.load %arg1[%c90] : memref<98xf32, #tpu.memory_space<smem>>
    %c0_334 = arith.constant 0 : index
    %c0_335 = arith.constant 0 : index
    %c86_336 = arith.constant 86 : index
    %555 = vector.load %arg7[%c0_334, %c0_335, %c86_336] : memref<1x1x358xf32, #tpu.memory_space<vmem>>, vector<1x1x256xf32>
    %556 = vector.broadcast %553 : f32 to vector<1x1x256xf32>
    %557 = arith.mulf %556, %555 : vector<1x1x256xf32>
    %558 = arith.addf %552, %557 : vector<1x1x256xf32>
    %c0_337 = arith.constant 0 : index
    %c0_338 = arith.constant 0 : index
    %c86_339 = arith.constant 86 : index
    %559 = vector.load %arg8[%c0_337, %c0_338, %c86_339] : memref<1x1x358xf32, #tpu.memory_space<vmem>>, vector<1x1x256xf32>
    %560 = vector.broadcast %554 : f32 to vector<1x1x256xf32>
    %561 = arith.mulf %560, %559 : vector<1x1x256xf32>
    %562 = arith.addf %558, %561 : vector<1x1x256xf32>
    %c48_340 = arith.constant 48 : index
    %563 = memref.load %arg1[%c48_340] : memref<98xf32, #tpu.memory_space<smem>>
    %c97_341 = arith.constant 97 : index
    %564 = memref.load %arg1[%c97_341] : memref<98xf32, #tpu.memory_space<smem>>
    %c0_342 = arith.constant 0 : index
    %c0_343 = arith.constant 0 : index
    %c102 = arith.constant 102 : index
    %565 = vector.load %arg7[%c0_342, %c0_343, %c102] : memref<1x1x358xf32, #tpu.memory_space<vmem>>, vector<1x1x256xf32>
    %566 = vector.broadcast %563 : f32 to vector<1x1x256xf32>
    %567 = arith.mulf %566, %565 : vector<1x1x256xf32>
    %568 = arith.addf %562, %567 : vector<1x1x256xf32>
    %c0_344 = arith.constant 0 : index
    %c0_345 = arith.constant 0 : index
    %c102_346 = arith.constant 102 : index
    %569 = vector.load %arg8[%c0_344, %c0_345, %c102_346] : memref<1x1x358xf32, #tpu.memory_space<vmem>>, vector<1x1x256xf32>
    %570 = vector.broadcast %564 : f32 to vector<1x1x256xf32>
    %571 = arith.mulf %570, %569 : vector<1x1x256xf32>
    %572 = arith.addf %568, %571 : vector<1x1x256xf32>
    %573 = vector.shape_cast %501 : vector<1x256xf32> to vector<1x1x256xf32>
    %574 = arith.mulf %573, %572 : vector<1x1x256xf32>
    %575 = arith.addf %500, %574 : vector<1x1x256xf32>
    %cst_347 = arith.constant 0.000000e+00 : f32
    %576 = vector.broadcast %cst_347 : f32 to vector<1x1x256xf32>
    %577 = arith.subf %576, %575 : vector<1x1x256xf32>
    %578 = math.exp %577 : vector<1x1x256xf32>
    %cst_348 = arith.constant 1.000000e+00 : f32
    %579 = vector.broadcast %cst_348 : f32 to vector<1x1x256xf32>
    %580 = arith.addf %579, %578 : vector<1x1x256xf32>
    %cst_349 = arith.constant 1.000000e+00 : f32
    %581 = vector.broadcast %cst_349 : f32 to vector<1x1x256xf32>
    %582 = arith.divf %581, %580 : vector<1x1x256xf32>
    %583 = vector.broadcast %582 : vector<1x1x256xf32> to vector<1x16x256xf32>
    %584 = arith.mulf %37, %583 : vector<1x16x256xf32>
    %c0_350 = arith.constant 0 : index
    %c0_351 = arith.constant 0 : index
    %c0_352 = arith.constant 0 : index
    %585 = vector.load %arg6[%c0_350, %c0_351, %c0_352] : memref<1x16x256xf32, #tpu.memory_space<vmem>>, vector<1x16x256xf32>
    tpu.vector_store %arg6[%c0_350, %c0_351, %c0_352], %584 {strides = array<i32>} : memref<1x16x256xf32, #tpu.memory_space<vmem>>, vector<1x16x256xf32>,
    return
  }
  func.func @transform_0(%arg0: i32) -> i32 {
    %c0_i32 = arith.constant 0 : i32
    %c0_i32_0 = arith.constant 0 : i32
    return %c0_i32 : i32
  }
  func.func @transform_1(%arg0: i32) -> (i32, i32, i32) {
    %c0_i32 = arith.constant 0 : i32
    %c0_i32_0 = arith.constant 0 : i32
    %c0_i32_1 = arith.constant 0 : i32
    %c0_i32_2 = arith.constant 0 : i32
    return %c0_i32, %c0_i32_0, %c0_i32_1 : i32, i32, i32
  }
  func.func @transform_2(%arg0: i32) -> (i32, i32, i32) {
    %c0_i32 = arith.constant 0 : i32
    %c0_i32_0 = arith.constant 0 : i32
    %c0_i32_1 = arith.constant 0 : i32
    %c0_i32_2 = arith.constant 0 : i32
    return %c0_i32, %c0_i32_0, %c0_i32_1 : i32, i32, i32
  }
  func.func @transform_3(%arg0: i32) -> (i32, i32) {
    %c0_i32 = arith.constant 0 : i32
    %c0_i32_0 = arith.constant 0 : i32
    %c0_i32_1 = arith.constant 0 : i32
    return %c0_i32, %c0_i32_0 : i32, i32
  }
  func.func @transform_4(%arg0: i32) -> (i32, i32, i32) {
    %c0_i32 = arith.constant 0 : i32
    %c0_i32_0 = arith.constant 0 : i32
    %c0_i32_1 = arith.constant 0 : i32
    return %arg0, %c0_i32, %c0_i32_0 : i32, i32, i32
  }
  func.func @transform_5(%arg0: i32) -> (i32, i32, i32) {
    %c0_i32 = arith.constant 0 : i32
    %c0_i32_0 = arith.constant 0 : i32
    %c0_i32_1 = arith.constant 0 : i32
    return %arg0, %c0_i32, %c0_i32_0 : i32, i32, i32
  }
}

</mosaic_0001>

<llo_original>
// kernel: tpu_custom_call.1
$region0: #{tpu_custom_call.1}
  #allocation0 [shape = 'u32[]', space=smem, size = 0x4, offset = 0x4, fixed_abs, tag = 'smem constant byte address 0x4 - core index']
  #allocation1 [shape = 'u32[144,128]{1,0:T(1,128)}', space=vmem, size = 0x12000, scoped, tag = 'internal scratch']
  #allocation2 [shape = 'f32[1,1,358]{2,1,0:T(1,128)}', space=vmem, size = 0x600, scoped, tag = 'scratch operand']
  #allocation3 [shape = 'f32[1,1,358]{2,1,0:T(1,128)}', space=vmem, size = 0x600, scoped, tag = 'scratch operand']
  %s0 = inlined_call_operand.vmem [shape: f32[98], index: 0, kind: input, shape index: {}]
  %s1 = inlined_call_operand.vmem [shape: f32[2,16,1], index: 1, kind: input, shape index: {}]
  %s2 = inlined_call_operand.vmem [shape: f32[16,2,1], index: 2, kind: input, shape index: {}]
  %s3 = inlined_call_operand.vmem [shape: f32[7,256], index: 3, kind: input, shape index: {}]
  %s4 = inlined_call_operand.vmem [shape: f32[2,16,256], index: 4, kind: input, shape index: {}]
  %s5 = inlined_call_operand.hbm [shape: f32[2,16,256], index: 5, kind: output, shape index: {}]
  %s6 = sld [smem:[#allocation0]]
  $region57: #{tpu_custom_call.1} parent=0
    _
  %s8 = ssub.s32 1, %s6
  %s9 = scalar_select 0, %s8, %s6
  $region1: #{tpu_custom_call.1} parent=0
    #allocation4 [shape = 'u8[512]{0}', space=smem, size = 0x200, scoped, tag = 'input window, operand 0, single buffered']
    #allocation5 [shape = 's32[2]{0}', space=sflag, size = 0x8, scoped, tag = 'scoped memory for tpu_custom_call.1']
    #allocation6 [shape = 's32[2]{0}', space=sflag, size = 0x8, scoped, tag = 'scoped memory for tpu_custom_call.1']
    #allocation7 [shape = 'u8[32768]{0}', space=vmem, size = 0x8000, scoped, tag = 'output window, operand 0']
    %10 = vsyncpa [#allocation6], 0
    %11 = vsyncpa [#allocation5], 0
    %s12 = scalar_lea.sflag [#allocation5], 1
    %13 = vsyncpa %s12, 0
    loop: start=0, step=1, limit=4
    $region2: #{tpu_custom_call.1} parent=1 // loop_pre_header
      _
    $region3: #{tpu_custom_call.1} parent=1 // loop_header
      %s15 = sphi 0, %s19
      %p16 = scmp.ge.s32.totalorder %s15, 4
      %s23 = sphi 0, %s23
      %s25 = sphi 0, %s23
      %s26 = sphi 0, %s25
      %s40 = sphi 0, %s26
      %s44 = sphi 0, %s44
      %s46 = sphi 0, %s44
      %s47 = sphi 0, %s46
      %s61 = sphi 0, %s47
      %s65 = sphi 0, %s65
      %s67 = sphi 0, %s65
      %s68 = sphi 0, %s67
      %s82 = sphi 0, %s68
      %s86 = sphi 0, %s86
      %s88 = sphi 0, %s86
      %s89 = sphi 0, %s88
      %s103 = sphi 0, %s89
      %s109 = sphi 0, %s111
      %s112 = sphi 0, %s109
      %s113 = sphi 0, %s112
      %s129 = sphi 0, %s113
      %s135 = sphi 0, %s137
      %s138 = sphi 0, %s135
      %s139 = sphi 0, %s138
      %s155 = sphi 0, %s139
    $region4: #{tpu_custom_call.1} parent=1 // loop_header_branch
      %18 = sbr.rel (%p16) target = $region8
    $region5: #{tpu_custom_call.1} parent=1 // loop_body
      %s20 = ssub.s32 %s15, 1
      %s21 = ssub.s32 %s15, 2
      %s22 = sadd.s32 %s15, 1
      %s24 = sadd.s32 %s23, 1
      %p27 = scmp.eq.s32.totalorder %s15, 1
      %p28 = scmp.ne.s32.totalorder %s23, %s25
      %p29 = scmp.eq.s32.totalorder %s15, 0
      %p30 = por %p28, %p29
      %p31 = scmp.ne.s32.totalorder %s23, %s25
      %p32 = scmp.eq.s32.totalorder %s20, 1
      %p33 = por %p31, %p32
      %p34 = scmp.ne.s32.totalorder %s25, %s26
      %p35 = scmp.eq.s32.totalorder %s20, 0
      %p36 = por %p34, %p35
      %p37 = scmp.ne.s32.totalorder %s25, %s26
      %p38 = scmp.eq.s32.totalorder %s21, 1
      %p39 = por %p37, %p38
      %p41 = scmp.ne.s32.totalorder %s26, %s40
      %p42 = scmp.eq.s32.totalorder %s21, 0
      %p43 = por %p41, %p42
      %s45 = sadd.s32 %s44, 1
      %p48 = scmp.eq.s32.totalorder %s15, 1
      %p49 = scmp.ne.s32.totalorder %s44, %s46
      %p50 = scmp.eq.s32.totalorder %s15, 0
      %p51 = por %p49, %p50
      %p52 = scmp.ne.s32.totalorder %s44, %s46
      %p53 = scmp.eq.s32.totalorder %s20, 1
      %p54 = por %p52, %p53
      %p55 = scmp.ne.s32.totalorder %s46, %s47
      %p56 = scmp.eq.s32.totalorder %s20, 0
      %p57 = por %p55, %p56
      %p58 = scmp.ne.s32.totalorder %s46, %s47
      %p59 = scmp.eq.s32.totalorder %s21, 1
      %p60 = por %p58, %p59
      %p62 = scmp.ne.s32.totalorder %s47, %s61
      %p63 = scmp.eq.s32.totalorder %s21, 0
      %p64 = por %p62, %p63
      %s66 = sadd.s32 %s65, 1
      %p69 = scmp.eq.s32.totalorder %s15, 1
      %p70 = scmp.ne.s32.totalorder %s65, %s67
      %p71 = scmp.eq.s32.totalorder %s15, 0
      %p72 = por %p70, %p71
      %p73 = scmp.ne.s32.totalorder %s65, %s67
      %p74 = scmp.eq.s32.totalorder %s20, 1
      %p75 = por %p73, %p74
      %p76 = scmp.ne.s32.totalorder %s67, %s68
      %p77 = scmp.eq.s32.totalorder %s20, 0
      %p78 = por %p76, %p77
      %p79 = scmp.ne.s32.totalorder %s67, %s68
      %p80 = scmp.eq.s32.totalorder %s21, 1
      %p81 = por %p79, %p80
      %p83 = scmp.ne.s32.totalorder %s68, %s82
      %p84 = scmp.eq.s32.totalorder %s21, 0
      %p85 = por %p83, %p84
      %s87 = sadd.s32 %s86, 1
      %p90 = scmp.eq.s32.totalorder %s15, 1
      %p91 = scmp.ne.s32.totalorder %s86, %s88
      %p92 = scmp.eq.s32.totalorder %s15, 0
      %p93 = por %p91, %p92
      %p94 = scmp.ne.s32.totalorder %s86, %s88
      %p95 = scmp.eq.s32.totalorder %s20, 1
      %p96 = por %p94, %p95
      %p97 = scmp.ne.s32.totalorder %s88, %s89
      %p98 = scmp.eq.s32.totalorder %s20, 0
      %p99 = por %p97, %p98
      %p100 = scmp.ne.s32.totalorder %s88, %s89
      %p101 = scmp.eq.s32.totalorder %s21, 1
      %p102 = por %p100, %p101
      %p104 = scmp.ne.s32.totalorder %s89, %s103
      %p105 = scmp.eq.s32.totalorder %s21, 0
      %p106 = por %p104, %p105
      %s107 = ssub.s32 %s15, %s22
      %p108 = scmp.eq.s32.totalorder %s107, 0
      %s110 = sadd.s32 %s109, 1
      %s111 = scalar_select %p108, %s109, %s110
      %p114 = pneg %p108
      %p115 = scmp.eq.s32.totalorder %s15, 1
      %p116 = por %p114, %p115
      %p117 = scmp.ne.s32.totalorder %s109, %s112
      %p118 = scmp.eq.s32.totalorder %s15, 0
      %p119 = por %p117, %p118
      %p120 = scmp.ne.s32.totalorder %s109, %s112
      %p121 = scmp.eq.s32.totalorder %s20, 1
      %p122 = por %p120, %p121
      %p123 = scmp.ne.s32.totalorder %s112, %s113
      %p124 = scmp.eq.s32.totalorder %s20, 0
      %p125 = por %p123, %p124
      %p126 = scmp.ne.s32.totalorder %s112, %s113
      %p127 = scmp.eq.s32.totalorder %s21, 1
      %p128 = por %p126, %p127
      %p130 = scmp.ne.s32.totalorder %s113, %s129
      %p131 = scmp.eq.s32.totalorder %s21, 0
      %p132 = por %p130, %p131
      %s133 = ssub.s32 %s15, %s22
      %p134 = scmp.eq.s32.totalorder %s133, 0
      %s136 = sadd.s32 %s135, 1
      %s137 = scalar_select %p134, %s135, %s136
      %p140 = pneg %p134
      %p141 = scmp.eq.s32.totalorder %s15, 1
      %p142 = por %p140, %p141
      %p143 = scmp.ne.s32.totalorder %s135, %s138
      %p144 = scmp.eq.s32.totalorder %s15, 0
      %p145 = por %p143, %p144
      %p146 = scmp.ne.s32.totalorder %s135, %s138
      %p147 = scmp.eq.s32.totalorder %s20, 1
      %p148 = por %p146, %p147
      %p149 = scmp.ne.s32.totalorder %s138, %s139
      %p150 = scmp.eq.s32.totalorder %s20, 0
      %p151 = por %p149, %p150
      %p152 = scmp.ne.s32.totalorder %s138, %s139
      %p153 = scmp.eq.s32.totalorder %s21, 1
      %p154 = por %p152, %p153
      %p156 = scmp.ne.s32.totalorder %s139, %s155
      %p157 = scmp.eq.s32.totalorder %s21, 0
      %p158 = por %p156, %p157
      %p159 = scmp.le.s32.totalorder 1, %s15
      %p160 = scmp.lt.s32.totalorder %s15, 3
      %p161 = pnand %p159, %p160
      %p162 = pneg %p161
      // Predicated region
      $region9: #{tpu_custom_call.1} parent=5 // pred_check
        _
      $region10: #{tpu_custom_call.1} parent=5 // pred_check_branch
        %164 = sbr.rel (%p161) target = $region12
      $region11: #{tpu_custom_call.1} parent=5 // pred_region
        %s165 = ssub.s32 %s15, 1
        // Predicated region
        $region13: #{tpu_custom_call.1} parent=11 // pred_check
          %p166 = pneg %p36
        $region14: #{tpu_custom_call.1} parent=11 // pred_check_branch
          %168 = sbr.rel (%p166) target = $region16
        $region15: #{tpu_custom_call.1} parent=11 // pred_region
          %s170 = ssub.s32 16, 16
          %171 = vsyncadd [#allocation6], %s170
          %s173 = sshll.u32 %s0, 4
          %s174 = int_to_ptr.vmem [resolvable:$true] %s173
          %176 = dma.vmem_to_smem %s174, 16, [#allocation4], [#allocation6]
        $region16: #{tpu_custom_call.1} parent=11 // pred_fallthru
          _
        // Predicated region
        $region17: #{tpu_custom_call.1} parent=11 // pred_check
          %p177 = pneg %p57
        $region18: #{tpu_custom_call.1} parent=11 // pred_check_branch
          %179 = sbr.rel (%p177) target = $region20
        $region19: #{tpu_custom_call.1} parent=11 // pred_region
          _
        $region20: #{tpu_custom_call.1} parent=11 // pred_fallthru
          _
        // Predicated region
        $region21: #{tpu_custom_call.1} parent=11 // pred_check
          %p180 = pneg %p78
        $region22: #{tpu_custom_call.1} parent=11 // pred_check_branch
          %182 = sbr.rel (%p180) target = $region24
        $region23: #{tpu_custom_call.1} parent=11 // pred_region
          _
        $region24: #{tpu_custom_call.1} parent=11 // pred_fallthru
          _
        // Predicated region
        $region25: #{tpu_custom_call.1} parent=11 // pred_check
          %p183 = pneg %p99
        $region26: #{tpu_custom_call.1} parent=11 // pred_check_branch
          %185 = sbr.rel (%p183) target = $region28
        $region27: #{tpu_custom_call.1} parent=11 // pred_region
          _
        $region28: #{tpu_custom_call.1} parent=11 // pred_fallthru
          _
      $region12: #{tpu_custom_call.1} parent=5 // pred_fallthru
        _
      %p186 = scmp.lt.s32.totalorder %s15, 2
      // Predicated region
      $region29: #{tpu_custom_call.1} parent=5 // pred_check
        %p187 = pneg %p186
      $region30: #{tpu_custom_call.1} parent=5 // pred_check_branch
        %189 = sbr.rel (%p187) target = $region32
      $region31: #{tpu_custom_call.1} parent=5 // pred_region
        // Predicated region
        $region33: #{tpu_custom_call.1} parent=31 // pred_check
          %p190 = pneg %p119
        $region34: #{tpu_custom_call.1} parent=31 // pred_check_branch
          %192 = sbr.rel (%p190) target = $region36
        $region35: #{tpu_custom_call.1} parent=31 // pred_region
          %p193 = scmp.lt.s32.totalorder %s15, 1
          %s194 = scalar_select %p193, %s15, 1
          %s195 = smul.addr %s194, 4
          %s196 = smul.addr %s195, 8
          %s197 = scalar_lea.vmem %s4, %s196
        $region36: #{tpu_custom_call.1} parent=31 // pred_fallthru
          _
      $region32: #{tpu_custom_call.1} parent=5 // pred_fallthru
        _
      %p198 = scmp.le.s32.totalorder 1, %s15
      %p199 = scmp.lt.s32.totalorder %s15, 3
      %p200 = pnand %p198, %p199
      %p201 = pneg %p200
      // Predicated region
      $region37: #{tpu_custom_call.1} parent=5 // pred_check
        _
      $region38: #{tpu_custom_call.1} parent=5 // pred_check_branch
        %203 = sbr.rel (%p200) target = $region40
      $region39: #{tpu_custom_call.1} parent=5 // pred_region
        %s204 = ssub.s32 %s15, 1
        // Predicated region
        $region41: #{tpu_custom_call.1} parent=39 // pred_check
          %p205 = pneg %p36
        $region42: #{tpu_custom_call.1} parent=39 // pred_check_branch
          %207 = sbr.rel (%p205) target = $region44
        $region43: #{tpu_custom_call.1} parent=39 // pred_region
          %208 = dma.done [#allocation6], 16
        $region44: #{tpu_custom_call.1} parent=39 // pred_fallthru
          _
        %209 = sfence
        %p210 = pneg %p36
        %p211 = pneg %p33
        %p212 = pneg %p57
        %p213 = pneg %p54
        %p214 = pneg %p78
        %p215 = pneg %p75
        %p216 = pneg %p99
        %p217 = pneg %p96
        %p218 = scmp.lt.s32.totalorder %s20, 1
        %s219 = scalar_select %p218, %s20, 1
        %s220 = smul.addr %s219, 4
        %s221 = smul.addr %s220, 8
        %s222 = scalar_lea.vmem %s4, %s221
        %p223 = pneg %p125
        %p224 = pneg %p122
        %p225 = pneg %p151
        %p226 = pneg %p148
        %s227 = sand.u32 %s138, 1
        %s228 = scalar_lea.sflag [#allocation5], %s227
        %s229 = sand.u32 %s138, 1
        %s230 = smul.addr %s229, 32
        %s231 = scalar_lea.vmem [#allocation7], %s230
        %p232 = scmp.lt.s32.totalorder %s20, 1
        %s233 = scalar_select %p232, %s20, 1
        %s234 = smul.addr %s233, 4
        %s235 = smul.addr %s234, 8
        %s236 = scalar_lea.vmem %s4, %s235
        %v237 = vld [vmem:[%s236] sm:$0xff]
        %v238 = vld [vmem:[%s236 + $0x8] sm:$0xff]
        %v239 = vld [vmem:[%s236 + $0x10] sm:$0xff]
        %v240 = vld [vmem:[%s236 + $0x18] sm:$0xff]
        %v241 = vadd.f32 %v237, %v238
        %242 = vadd.xlane.f32.xlu0 %v241
        %v243 = vpop.xlane.xlu0 %242
        %v244 = vadd.f32 %v239, %v240
        %245 = vadd.xlane.f32.xlu0 %v244
        %v246 = vpop.xlane.xlu0 %245
        %v247 = vrcp.pop 256.0
        %v248 = vmul.f32 %v243, %v247
        %v249 = vmul.f32 %v246, %v247
        %v250 = vmax.f32 %v237, %v238
        %251 = vmax.xlane.f32.xlu0 %v250
        %v252 = vpop.xlane.xlu0 %251
        %v253 = vmax.f32 %v239, %v240
        %254 = vmax.xlane.f32.xlu0 %v253
        %v255 = vpop.xlane.xlu0 %254
        %v256 = vld [vmem:[%s1] sm:$0xff]
        %v257 = vld [vmem:[%s1 + $0x8] sm:$0xff]
        %v258 = vld [vmem:[%s1 + $0x10] sm:$0xff]
        %v259 = vld [vmem:[%s1 + $0x18] sm:$0xff]
        %v260 = vld [vmem:[%s2] sm:$0x3]
        %v261 = vld [vmem:[%s2 + $0x2] sm:$0x3]
        %v262 = vld [vmem:[%s2 + $0x4] sm:$0x3]
        %v263 = vld [vmem:[%s2 + $0x6] sm:$0x3]
        %v264 = vld [vmem:[%s2 + $0x8] sm:$0x3]
        %v265 = vld [vmem:[%s2 + $0xa] sm:$0x3]
        %v266 = vld [vmem:[%s2 + $0xc] sm:$0x3]
        %v267 = vld [vmem:[%s2 + $0xe] sm:$0x3]
        %v268 = vld [vmem:[%s2 + $0x10] sm:$0x3]
        %v269 = vld [vmem:[%s2 + $0x12] sm:$0x3]
        %v270 = vld [vmem:[%s2 + $0x14] sm:$0x3]
        %v271 = vld [vmem:[%s2 + $0x16] sm:$0x3]
        %v272 = vld [vmem:[%s2 + $0x18] sm:$0x3]
        %v273 = vld [vmem:[%s2 + $0x1a] sm:$0x3]
        %v274 = vld [vmem:[%s2 + $0x1c] sm:$0x3]
        %v275 = vld [vmem:[%s2 + $0x1e] sm:$0x3]
        %v276 = vmul.f32 %v248, %v256
        %v277 = vmul.f32 %v249, %v257
        %v278 = vmul.f32 %v248, %v258
        %v279 = vmul.f32 %v249, %v259
        %vm280 = vcmask 7168
        %v281 = vsel %vm280, %v276, 0.0
        %v282 = vsel %vm280, %v277, 0.0
        %v283 = vadd.f32 %v281, %v282
        %v284 = vrot.slane %v283, 4
        %v285 = vadd.f32 %v283, %v284
        %v286 = vrot.slane %v285, 2
        %v287 = vadd.f32 %v285, %v286
        %v288 = vrot.slane %v287, 1
        %v289 = vadd.f32 %v287, %v288
        %v290 = vsel %vm280, %v278, 0.0
        %v291 = vsel %vm280, %v279, 0.0
        %v292 = vadd.f32 %v290, %v291
        %v293 = vrot.slane %v292, 4
        %v294 = vadd.f32 %v292, %v293
        %v295 = vrot.slane %v294, 2
        %v296 = vadd.f32 %v294, %v295
        %v297 = vrot.slane %v296, 1
        %v298 = vadd.f32 %v296, %v297
        %v299 = vmul.f32 %v252, %v256
        %v300 = vmul.f32 %v255, %v257
        %v301 = vmul.f32 %v252, %v258
        %v302 = vmul.f32 %v255, %v259
        %v303 = vsel %vm280, %v299, 0.0
        %v304 = vsel %vm280, %v300, 0.0
        %v305 = vadd.f32 %v303, %v304
        %v306 = vrot.slane %v305, 4
        %v307 = vadd.f32 %v305, %v306
        %v308 = vrot.slane %v307, 2
        %v309 = vadd.f32 %v307, %v308
        %v310 = vrot.slane %v309, 1
        %v311 = vadd.f32 %v309, %v310
        %v312 = vsel %vm280, %v301, 0.0
        %v313 = vsel %vm280, %v302, 0.0
        %v314 = vadd.f32 %v312, %v313
        %v315 = vrot.slane %v314, 4
        %v316 = vadd.f32 %v314, %v315
        %v317 = vrot.slane %v316, 2
        %v318 = vadd.f32 %v316, %v317
        %v319 = vrot.slane %v318, 1
        %v320 = vadd.f32 %v318, %v319
        %v321 = vmax.f32 %v289, 0.0
        %v322 = vmax.f32 %v298, 0.0
        %v323 = vmax.f32 %v311, 0.0
        %v324 = vmax.f32 %v320, 0.0
        %v325 = vadd.f32 %v321, %v323
        %v326 = vadd.f32 %v322, %v324
        %v343 = vrot.slane %v260, 1
        %v344 = vrot.slane %v261, 1
        %v345 = vrot.slane %v262, 1
        %v346 = vrot.slane %v263, 1
        %v347 = vrot.slane %v264, 1
        %v348 = vrot.slane %v265, 1
        %v349 = vrot.slane %v266, 1
        %v350 = vrot.slane %v267, 1
        %v351 = vrot.slane %v268, 1
        %v352 = vrot.slane %v269, 1
        %v353 = vrot.slane %v270, 1
        %v354 = vrot.slane %v271, 1
        %v355 = vrot.slane %v272, 1
        %v356 = vrot.slane %v273, 1
        %v357 = vrot.slane %v274, 1
        %v358 = vrot.slane %v275, 1
        %v391 = vmul.f32 %v325, %v260
        %v392 = vmul.f32 %v326, %v343
        %v393 = vmul.f32 %v325, %v261
        %v394 = vmul.f32 %v326, %v344
        %v395 = vmul.f32 %v325, %v262
        %v396 = vmul.f32 %v326, %v345
        %v397 = vmul.f32 %v325, %v263
        %v398 = vmul.f32 %v326, %v346
        %v399 = vmul.f32 %v325, %v264
        %v400 = vmul.f32 %v326, %v347
        %v401 = vmul.f32 %v325, %v265
        %v402 = vmul.f32 %v326, %v348
        %v403 = vmul.f32 %v325, %v266
        %v404 = vmul.f32 %v326, %v349
        %v405 = vmul.f32 %v325, %v267
        %v406 = vmul.f32 %v326, %v350
        %v407 = vmul.f32 %v325, %v268
        %v408 = vmul.f32 %v326, %v351
        %v409 = vmul.f32 %v325, %v269
        %v410 = vmul.f32 %v326, %v352
        %v411 = vmul.f32 %v325, %v270
        %v412 = vmul.f32 %v326, %v353
        %v413 = vmul.f32 %v325, %v271
        %v414 = vmul.f32 %v326, %v354
        %v415 = vmul.f32 %v325, %v272
        %v416 = vmul.f32 %v326, %v355
        %v417 = vmul.f32 %v325, %v273
        %v418 = vmul.f32 %v326, %v356
        %v419 = vmul.f32 %v325, %v274
        %v420 = vmul.f32 %v326, %v357
        %v421 = vmul.f32 %v325, %v275
        %v422 = vmul.f32 %v326, %v358
        %v455 = vrot.slane %v392, 7
        %vm456 = vcmask 1041409
        %v457 = vsel %vm456, %v455, %v391
        %v458 = vrot.slane %v394, 7
        %v459 = vsel %vm456, %v458, %v393
        %v460 = vrot.slane %v396, 7
        %v461 = vsel %vm456, %v460, %v395
        %v462 = vrot.slane %v398, 7
        %v463 = vsel %vm456, %v462, %v397
        %v464 = vrot.slane %v400, 7
        %v465 = vsel %vm456, %v464, %v399
        %v466 = vrot.slane %v402, 7
        %v467 = vsel %vm456, %v466, %v401
        %v468 = vrot.slane %v404, 7
        %v469 = vsel %vm456, %v468, %v403
        %v470 = vrot.slane %v406, 7
        %v471 = vsel %vm456, %v470, %v405
        %v472 = vrot.slane %v408, 7
        %v473 = vsel %vm456, %v472, %v407
        %v474 = vrot.slane %v410, 7
        %v475 = vsel %vm456, %v474, %v409
        %v476 = vrot.slane %v412, 7
        %v477 = vsel %vm456, %v476, %v411
        %v478 = vrot.slane %v414, 7
        %v479 = vsel %vm456, %v478, %v413
        %v480 = vrot.slane %v416, 7
        %v481 = vsel %vm456, %v480, %v415
        %v482 = vrot.slane %v418, 7
        %v483 = vsel %vm456, %v482, %v417
        %v484 = vrot.slane %v420, 7
        %v485 = vsel %vm456, %v484, %v419
        %v486 = vrot.slane %v422, 7
        %v487 = vsel %vm456, %v486, %v421
        %vm504 = vcmask 1024
        %v505 = vsel %vm504, %v457, 0.0
        %v506 = vrot.slane %v505, 4
        %v507 = vadd.f32 %v505, %v506
        %v508 = vrot.slane %v507, 2
        %v509 = vadd.f32 %v507, %v508
        %v510 = vrot.slane %v509, 1
        %v511 = vadd.f32 %v509, %v510
        %v512 = vsel %vm504, %v459, 0.0
        %v513 = vrot.slane %v512, 4
        %v514 = vadd.f32 %v512, %v513
        %v515 = vrot.slane %v514, 2
        %v516 = vadd.f32 %v514, %v515
        %v517 = vrot.slane %v516, 1
        %v518 = vadd.f32 %v516, %v517
        %v519 = vsel %vm504, %v461, 0.0
        %v520 = vrot.slane %v519, 4
        %v521 = vadd.f32 %v519, %v520
        %v522 = vrot.slane %v521, 2
        %v523 = vadd.f32 %v521, %v522
        %v524 = vrot.slane %v523, 1
        %v525 = vadd.f32 %v523, %v524
        %v526 = vsel %vm504, %v463, 0.0
        %v527 = vrot.slane %v526, 4
        %v528 = vadd.f32 %v526, %v527
        %v529 = vrot.slane %v528, 2
        %v530 = vadd.f32 %v528, %v529
        %v531 = vrot.slane %v530, 1
        %v532 = vadd.f32 %v530, %v531
        %v533 = vsel %vm504, %v465, 0.0
        %v534 = vrot.slane %v533, 4
        %v535 = vadd.f32 %v533, %v534
        %v536 = vrot.slane %v535, 2
        %v537 = vadd.f32 %v535, %v536
        %v538 = vrot.slane %v537, 1
        %v539 = vadd.f32 %v537, %v538
        %v540 = vsel %vm504, %v467, 0.0
        %v541 = vrot.slane %v540, 4
        %v542 = vadd.f32 %v540, %v541
        %v543 = vrot.slane %v542, 2
        %v544 = vadd.f32 %v542, %v543
        %v545 = vrot.slane %v544, 1
        %v546 = vadd.f32 %v544, %v545
        %v547 = vsel %vm504, %v469, 0.0
        %v548 = vrot.slane %v547, 4
        %v549 = vadd.f32 %v547, %v548
        %v550 = vrot.slane %v549, 2
        %v551 = vadd.f32 %v549, %v550
        %v552 = vrot.slane %v551, 1
        %v553 = vadd.f32 %v551, %v552
        %v554 = vsel %vm504, %v471, 0.0
        %v555 = vrot.slane %v554, 4
        %v556 = vadd.f32 %v554, %v555
        %v557 = vrot.slane %v556, 2
        %v558 = vadd.f32 %v556, %v557
        %v559 = vrot.slane %v558, 1
        %v560 = vadd.f32 %v558, %v559
        %v561 = vsel %vm504, %v473, 0.0
        %v562 = vrot.slane %v561, 4
        %v563 = vadd.f32 %v561, %v562
        %v564 = vrot.slane %v563, 2
        %v565 = vadd.f32 %v563, %v564
        %v566 = vrot.slane %v565, 1
        %v567 = vadd.f32 %v565, %v566
        %v568 = vsel %vm504, %v475, 0.0
        %v569 = vrot.slane %v568, 4
        %v570 = vadd.f32 %v568, %v569
        %v571 = vrot.slane %v570, 2
        %v572 = vadd.f32 %v570, %v571
        %v573 = vrot.slane %v572, 1
        %v574 = vadd.f32 %v572, %v573
        %v575 = vsel %vm504, %v477, 0.0
        %v576 = vrot.slane %v575, 4
        %v577 = vadd.f32 %v575, %v576
        %v578 = vrot.slane %v577, 2
        %v579 = vadd.f32 %v577, %v578
        %v580 = vrot.slane %v579, 1
        %v581 = vadd.f32 %v579, %v580
        %v582 = vsel %vm504, %v479, 0.0
        %v583 = vrot.slane %v582, 4
        %v584 = vadd.f32 %v582, %v583
        %v585 = vrot.slane %v584, 2
        %v586 = vadd.f32 %v584, %v585
        %v587 = vrot.slane %v586, 1
        %v588 = vadd.f32 %v586, %v587
        %v589 = vsel %vm504, %v481, 0.0
        %v590 = vrot.slane %v589, 4
        %v591 = vadd.f32 %v589, %v590
        %v592 = vrot.slane %v591, 2
        %v593 = vadd.f32 %v591, %v592
        %v594 = vrot.slane %v593, 1
        %v595 = vadd.f32 %v593, %v594
        %v596 = vsel %vm504, %v483, 0.0
        %v597 = vrot.slane %v596, 4
        %v598 = vadd.f32 %v596, %v597
        %v599 = vrot.slane %v598, 2
        %v600 = vadd.f32 %v598, %v599
        %v601 = vrot.slane %v600, 1
        %v602 = vadd.f32 %v600, %v601
        %v603 = vsel %vm504, %v485, 0.0
        %v604 = vrot.slane %v603, 4
        %v605 = vadd.f32 %v603, %v604
        %v606 = vrot.slane %v605, 2
        %v607 = vadd.f32 %v605, %v606
        %v608 = vrot.slane %v607, 1
        %v609 = vadd.f32 %v607, %v608
        %v610 = vsel %vm504, %v487, 0.0
        %v611 = vrot.slane %v610, 4
        %v612 = vadd.f32 %v610, %v611
        %v613 = vrot.slane %v612, 2
        %v614 = vadd.f32 %v612, %v613
        %v615 = vrot.slane %v614, 1
        %v616 = vadd.f32 %v614, %v615
        %v617 = vsub.f32 0.0, %v511
        %v618 = vsub.f32 0.0, %v518
        %v619 = vsub.f32 0.0, %v525
        %v620 = vsub.f32 0.0, %v532
        %v621 = vsub.f32 0.0, %v539
        %v622 = vsub.f32 0.0, %v546
        %v623 = vsub.f32 0.0, %v553
        %v624 = vsub.f32 0.0, %v560
        %v625 = vsub.f32 0.0, %v567
        %v626 = vsub.f32 0.0, %v574
        %v627 = vsub.f32 0.0, %v581
        %v628 = vsub.f32 0.0, %v588
        %v629 = vsub.f32 0.0, %v595
        %v630 = vsub.f32 0.0, %v602
        %v631 = vsub.f32 0.0, %v609
        %v632 = vsub.f32 0.0, %v616
        %v633 = vmul.f32 %v617, 1.442695
        %v634 = vpow.pop %v633
        %v635 = vmul.f32 %v618, 1.442695
        %v636 = vpow.pop %v635
        %v637 = vmul.f32 %v619, 1.442695
        %v638 = vpow.pop %v637
        %v639 = vmul.f32 %v620, 1.442695
        %v640 = vpow.pop %v639
        %v641 = vmul.f32 %v621, 1.442695
        %v642 = vpow.pop %v641
        %v643 = vmul.f32 %v622, 1.442695
        %v644 = vpow.pop %v643
        %v645 = vmul.f32 %v623, 1.442695
        %v646 = vpow.pop %v645
        %v647 = vmul.f32 %v624, 1.442695
        %v648 = vpow.pop %v647
        %v649 = vmul.f32 %v625, 1.442695
        %v650 = vpow.pop %v649
        %v651 = vmul.f32 %v626, 1.442695
        %v652 = vpow.pop %v651
        %v653 = vmul.f32 %v627, 1.442695
        %v654 = vpow.pop %v653
        %v655 = vmul.f32 %v628, 1.442695
        %v656 = vpow.pop %v655
        %v657 = vmul.f32 %v629, 1.442695
        %v658 = vpow.pop %v657
        %v659 = vmul.f32 %v630, 1.442695
        %v660 = vpow.pop %v659
        %v661 = vmul.f32 %v631, 1.442695
        %v662 = vpow.pop %v661
        %v663 = vmul.f32 %v632, 1.442695
        %v664 = vpow.pop %v663
        %v665 = vadd.f32 %v634, 1.0
        %v666 = vadd.f32 %v636, 1.0
        %v667 = vadd.f32 %v638, 1.0
        %v668 = vadd.f32 %v640, 1.0
        %v669 = vadd.f32 %v642, 1.0
        %v670 = vadd.f32 %v644, 1.0
        %v671 = vadd.f32 %v646, 1.0
        %v672 = vadd.f32 %v648, 1.0
        %v673 = vadd.f32 %v650, 1.0
        %v674 = vadd.f32 %v652, 1.0
        %v675 = vadd.f32 %v654, 1.0
        %v676 = vadd.f32 %v656, 1.0
        %v677 = vadd.f32 %v658, 1.0
        %v678 = vadd.f32 %v660, 1.0
        %v679 = vadd.f32 %v662, 1.0
        %v680 = vadd.f32 %v664, 1.0
        %v681 = vrcp.pop %v665
        %v682 = vmul.f32 1.0, %v681
        %v683 = vrcp.pop %v666
        %v684 = vmul.f32 1.0, %v683
        %v685 = vrcp.pop %v667
        %v686 = vmul.f32 1.0, %v685
        %v687 = vrcp.pop %v668
        %v688 = vmul.f32 1.0, %v687
        %v689 = vrcp.pop %v669
        %v690 = vmul.f32 1.0, %v689
        %v691 = vrcp.pop %v670
        %v692 = vmul.f32 1.0, %v691
        %v693 = vrcp.pop %v671
        %v694 = vmul.f32 1.0, %v693
        %v695 = vrcp.pop %v672
        %v696 = vmul.f32 1.0, %v695
        %v697 = vrcp.pop %v673
        %v698 = vmul.f32 1.0, %v697
        %v699 = vrcp.pop %v674
        %v700 = vmul.f32 1.0, %v699
        %v701 = vrcp.pop %v675
        %v702 = vmul.f32 1.0, %v701
        %v703 = vrcp.pop %v676
        %v704 = vmul.f32 1.0, %v703
        %v705 = vrcp.pop %v677
        %v706 = vmul.f32 1.0, %v705
        %v707 = vrcp.pop %v678
        %v708 = vmul.f32 1.0, %v707
        %v709 = vrcp.pop %v679
        %v710 = vmul.f32 1.0, %v709
        %v711 = vrcp.pop %v680
        %v712 = vmul.f32 1.0, %v711
        %714 = vset.pattern.permute.xlu0 0
        %715 = vperm.xlu0 %714, %v682
        %v716 = vpop.permute.xlu0 %715
        %718 = vset.pattern.permute.xlu0 0
        %719 = vperm.xlu0 %718, %v684
        %v720 = vpop.permute.xlu0 %719
        %722 = vset.pattern.permute.xlu0 0
        %723 = vperm.xlu0 %722, %v686
        %v724 = vpop.permute.xlu0 %723
        %726 = vset.pattern.permute.xlu0 0
        %727 = vperm.xlu0 %726, %v688
        %v728 = vpop.permute.xlu0 %727
        %730 = vset.pattern.permute.xlu0 0
        %731 = vperm.xlu0 %730, %v690
        %v732 = vpop.permute.xlu0 %731
        %734 = vset.pattern.permute.xlu0 0
        %735 = vperm.xlu0 %734, %v692
        %v736 = vpop.permute.xlu0 %735
        %738 = vset.pattern.permute.xlu0 0
        %739 = vperm.xlu0 %738, %v694
        %v740 = vpop.permute.xlu0 %739
        %742 = vset.pattern.permute.xlu0 0
        %743 = vperm.xlu0 %742, %v696
        %v744 = vpop.permute.xlu0 %743
        %746 = vset.pattern.permute.xlu0 0
        %747 = vperm.xlu0 %746, %v698
        %v748 = vpop.permute.xlu0 %747
        %750 = vset.pattern.permute.xlu0 0
        %751 = vperm.xlu0 %750, %v700
        %v752 = vpop.permute.xlu0 %751
        %754 = vset.pattern.permute.xlu0 0
        %755 = vperm.xlu0 %754, %v702
        %v756 = vpop.permute.xlu0 %755
        %758 = vset.pattern.permute.xlu0 0
        %759 = vperm.xlu0 %758, %v704
        %v760 = vpop.permute.xlu0 %759
        %762 = vset.pattern.permute.xlu0 0
        %763 = vperm.xlu0 %762, %v706
        %v764 = vpop.permute.xlu0 %763
        %766 = vset.pattern.permute.xlu0 0
        %767 = vperm.xlu0 %766, %v708
        %v768 = vpop.permute.xlu0 %767
        %770 = vset.pattern.permute.xlu0 0
        %771 = vperm.xlu0 %770, %v710
        %v772 = vpop.permute.xlu0 %771
        %774 = vset.pattern.permute.xlu0 0
        %775 = vperm.xlu0 %774, %v712
        %v776 = vpop.permute.xlu0 %775
        %v777 = vrot.slane %v720, 7
        %v778 = vsel %vm456, %v777, %v716
        %v779 = vrot.slane %v724, 6
        %vm780 = vcmask 1042434
        %v781 = vsel %vm780, %v779, %v778
        %v782 = vrot.slane %v728, 5
        %vm783 = vcmask 1043459
        %v784 = vsel %vm783, %v782, %v781
        %v785 = vrot.slane %v732, 4
        %vm786 = vcmask 1044484
        %v787 = vsel %vm786, %v785, %v784
        %v788 = vrot.slane %v736, 3
        %vm789 = vcmask 1045509
        %v790 = vsel %vm789, %v788, %v787
        %v791 = vrot.slane %v740, 2
        %vm792 = vcmask 1046534
        %v793 = vsel %vm792, %v791, %v790
        %v794 = vrot.slane %v744, 1
        %vm795 = vcmask 1047559
        %v796 = vsel %vm795, %v794, %v793
        %v797 = vrot.slane %v752, 7
        %v798 = vsel %vm456, %v797, %v748
        %v799 = vrot.slane %v756, 6
        %v800 = vsel %vm780, %v799, %v798
        %v801 = vrot.slane %v760, 5
        %v802 = vsel %vm783, %v801, %v800
        %v803 = vrot.slane %v764, 4
        %v804 = vsel %vm786, %v803, %v802
        %v805 = vrot.slane %v768, 3
        %v806 = vsel %vm789, %v805, %v804
        %v807 = vrot.slane %v772, 2
        %v808 = vsel %vm792, %v807, %v806
        %v809 = vrot.slane %v776, 1
        %v810 = vsel %vm795, %v809, %v808
        %v813 = vmul.f32 %v237, %v796
        %v814 = vmul.f32 %v238, %v796
        %v815 = vmul.f32 %v239, %v810
        %v816 = vmul.f32 %v240, %v810
        %v817 = vadd.f32 %v813, %v815
        %v818 = vrot.slane %v817, 4
        %v819 = vadd.f32 %v817, %v818
        %v820 = vrot.slane %v819, 2
        %v821 = vadd.f32 %v819, %v820
        %v822 = vrot.slane %v821, 1
        %v823 = vadd.f32 %v821, %v822
        %v824 = vadd.f32 %v814, %v816
        %v825 = vrot.slane %v824, 4
        %v826 = vadd.f32 %v824, %v825
        %v827 = vrot.slane %v826, 2
        %v828 = vadd.f32 %v826, %v827
        %v829 = vrot.slane %v828, 1
        %v830 = vadd.f32 %v828, %v829
        %v831 = vrcp.pop 16.0
        %v832 = vmul.f32 %v823, %v831
        %v833 = vmul.f32 %v830, %v831
        %v834 = vmax.f32 %v813, %v815
        %v835 = vrot.slane %v834, 4
        %v836 = vmax.f32 %v834, %v835
        %v837 = vrot.slane %v836, 2
        %v838 = vmax.f32 %v836, %v837
        %v839 = vrot.slane %v838, 1
        %v840 = vmax.f32 %v838, %v839
        %v841 = vmax.f32 %v814, %v816
        %v842 = vrot.slane %v841, 4
        %v843 = vmax.f32 %v841, %v842
        %v844 = vrot.slane %v843, 2
        %v845 = vmax.f32 %v843, %v844
        %v846 = vrot.slane %v845, 1
        %v847 = vmax.f32 %v845, %v846
        %v848 = vlaneseq
        %vm849 = vcmp.ge.s32.totalorder %v848, 0
        %vm850 = vcmp.lt.s32.totalorder %v848, 358
        %vm851 = vmand %vm849, %vm850
        %852 = vst.msk [vmem:[#allocation2] sm:$0x7] %vm851, 0.0
        %853 = vst.msk [vmem:[#allocation3] sm:$0x7] %vm851, 0.0
        %v856 = vcombine.low %v832, %v833
        %v858 = vunpack.c.l.s4 1966171168
        %v859 = vunpack.c.0.s8 %v858
        %v860 = vlaneseq
        %v861 = vshrl.u32 %v860, 7
        %v862 = vsub.s32 %v859, %v861
        %v863 = vrot.slane %v856, %v862
        %v865 = vunpack.c.l.s4 1966171168
        %v866 = vunpack.c.0.s8 %v865
        %v867 = vlaneseq
        %v868 = vshrl.u32 %v867, 7
        %v869 = vsub.s32 %v866, %v868
        %v870 = vrot.slane %v863, %v869
        %871 = vrot.lane.b32.xlu0 %v870, 51
        %v872 = vpop.permute.xlu0 %871
        %v873 = vrot.slane %v872, 7
        %vm874 = vcmask 416768
        %v875 = vsel %vm874, %v873, %v872
        %vm877 = vcmp.ge.s32.totalorder %v848, 51
        %vm878 = vcmp.lt.s32.totalorder %v848, 307
        %vm879 = vmand %vm877, %vm878
        %880 = vst.msk [vmem:[#allocation2] sm:$0x7] %vm879, %v875
        %v883 = vcombine.low %v840, %v847
        %v885 = vunpack.c.l.s4 1966171168
        %v886 = vunpack.c.0.s8 %v885
        %v887 = vlaneseq
        %v888 = vshrl.u32 %v887, 7
        %v889 = vsub.s32 %v886, %v888
        %v890 = vrot.slane %v883, %v889
        %v892 = vunpack.c.l.s4 1966171168
        %v893 = vunpack.c.0.s8 %v892
        %v894 = vlaneseq
        %v895 = vshrl.u32 %v894, 7
        %v896 = vsub.s32 %v893, %v895
        %v897 = vrot.slane %v890, %v896
        %898 = vrot.lane.b32.xlu0 %v897, 51
        %v899 = vpop.permute.xlu0 %898
        %v900 = vrot.slane %v899, 7
        %v901 = vsel %vm874, %v900, %v899
        %903 = vst.msk [vmem:[#allocation3] sm:$0x7] %vm879, %v901
        %v904 = vld [vmem:[%s3] ss:$8 sm:$0x3]
        %s905 = sld [smem:[#allocation4]]
        %s906 = sld [smem:[#allocation4 + $0x31]]
        %v907 = vld [vmem:[#allocation2] sm:$0x3]
        %v908 = vstv %s905
        %v909 = vmul.f32 %v908, %v907
        %v910 = vadd.f32 %v909, 0.0
        %v911 = vld [vmem:[#allocation3] sm:$0x3]
        %v912 = vstv %s906
        %v913 = vmul.f32 %v912, %v911
        %v914 = vadd.f32 %v910, %v913
        %s915 = sld [smem:[#allocation4 + $0x7]]
        %s916 = sld [smem:[#allocation4 + $0x38]]
        %v917 = vld [vmem:[#allocation2] sm:$0x7]
        %v918 = vstv %s915
        %v919 = vmul.f32 %v918, %v917
        %921 = vrot.lane.b32.xlu0 %v919, 112
        %v922 = vpop.permute.xlu0 %921
        %v923 = vrot.slane %v922, 1
        %vm924 = vcmask 916480
        %v925 = vsel %vm924, %v922, %v923
        %v927 = vadd.f32 %v914, %v925
        %v928 = vld [vmem:[#allocation3] sm:$0x7]
        %v929 = vstv %s916
        %v930 = vmul.f32 %v929, %v928
        %932 = vrot.lane.b32.xlu0 %v930, 112
        %v933 = vpop.permute.xlu0 %932
        %v934 = vrot.slane %v933, 1
        %v935 = vsel %vm924, %v933, %v934
        %v937 = vadd.f32 %v927, %v935
        %s938 = sld [smem:[#allocation4 + $0xe]]
        %s939 = sld [smem:[#allocation4 + $0x3f]]
        %v940 = vstv %s938
        %v941 = vmul.f32 %v940, %v917
        %943 = vrot.lane.b32.xlu0 %v941, 96
        %v944 = vpop.permute.xlu0 %943
        %v945 = vrot.slane %v944, 1
        %vm946 = vcmask 785408
        %v947 = vsel %vm946, %v944, %v945
        %v949 = vadd.f32 %v937, %v947
        %v950 = vstv %s939
        %v951 = vmul.f32 %v950, %v928
        %953 = vrot.lane.b32.xlu0 %v951, 96
        %v954 = vpop.permute.xlu0 %953
        %v955 = vrot.slane %v954, 1
        %v956 = vsel %vm946, %v954, %v955
        %v958 = vadd.f32 %v949, %v956
        %s959 = sld [smem:[#allocation4 + $0x15]]
        %s960 = sld [smem:[#allocation4 + $0x46]]
        %v961 = vstv %s959
        %v962 = vmul.f32 %v961, %v917
        %964 = vrot.lane.b32.xlu0 %v962, 80
        %v965 = vpop.permute.xlu0 %964
        %v966 = vrot.slane %v965, 1
        %vm967 = vcmask 654336
        %v968 = vsel %vm967, %v965, %v966
        %v970 = vadd.f32 %v958, %v968
        %v971 = vstv %s960
        %v972 = vmul.f32 %v971, %v928
        %974 = vrot.lane.b32.xlu0 %v972, 80
        %v975 = vpop.permute.xlu0 %974
        %v976 = vrot.slane %v975, 1
        %v977 = vsel %vm967, %v975, %v976
        %v979 = vadd.f32 %v970, %v977
        %s980 = sld [smem:[#allocation4 + $0x1c]]
        %s981 = sld [smem:[#allocation4 + $0x4d]]
        %v982 = vstv %s980
        %v983 = vmul.f32 %v982, %v917
        %985 = vrot.lane.b32.xlu0 %v983, 64
        %v986 = vpop.permute.xlu0 %985
        %v987 = vrot.slane %v986, 1
        %vm988 = vcmask 523264
        %v989 = vsel %vm988, %v986, %v987
        %v991 = vadd.f32 %v979, %v989
        %v992 = vstv %s981
        %v993 = vmul.f32 %v992, %v928
        %995 = vrot.lane.b32.xlu0 %v993, 64
        %v996 = vpop.permute.xlu0 %995
        %v997 = vrot.slane %v996, 1
        %v998 = vsel %vm988, %v996, %v997
        %v1000 = vadd.f32 %v991, %v998
        %s1001 = sld [smem:[#allocation4 + $0x23]]
        %s1002 = sld [smem:[#allocation4 + $0x54]]
        %v1003 = vstv %s1001
        %v1004 = vmul.f32 %v1003, %v917
        %1006 = vrot.lane.b32.xlu0 %v1004, 48
        %v1007 = vpop.permute.xlu0 %1006
        %v1008 = vrot.slane %v1007, 1
        %vm1009 = vcmask 392192
        %v1010 = vsel %vm1009, %v1007, %v1008
        %v1012 = vadd.f32 %v1000, %v1010
        %v1013 = vstv %s1002
        %v1014 = vmul.f32 %v1013, %v928
        %1016 = vrot.lane.b32.xlu0 %v1014, 48
        %v1017 = vpop.permute.xlu0 %1016
        %v1018 = vrot.slane %v1017, 1
        %v1019 = vsel %vm1009, %v1017, %v1018
        %v1021 = vadd.f32 %v1012, %v1019
        %s1022 = sld [smem:[#allocation4 + $0x2a]]
        %s1023 = sld [smem:[#allocation4 + $0x5b]]
        %v1024 = vstv %s1022
        %v1025 = vmul.f32 %v1024, %v917
        %1027 = vrot.lane.b32.xlu0 %v1025, 32
        %v1028 = vpop.permute.xlu0 %1027
        %v1029 = vrot.slane %v1028, 1
        %vm1030 = vcmask 261120
        %v1031 = vsel %vm1030, %v1028, %v1029
        %v1033 = vadd.f32 %v1021, %v1031
        %v1034 = vstv %s1023
        %v1035 = vmul.f32 %v1034, %v928
        %1037 = vrot.lane.b32.xlu0 %v1035, 32
        %v1038 = vpop.permute.xlu0 %1037
        %v1039 = vrot.slane %v1038, 1
        %v1040 = vsel %vm1030, %v1038, %v1039
        %v1042 = vadd.f32 %v1033, %v1040
        %v1043 = vmul.f32 %v904, %v1042
        %v1044 = vadd.f32 %v1043, 0.0
        %s1045 = scalar_lea.vmem %s3, 1
        %v1046 = vld [vmem:[%s1045] ss:$8 sm:$0x3]
        %s1047 = sld [smem:[#allocation4 + $0x1]]
        %s1048 = sld [smem:[#allocation4 + $0x32]]
        %v1049 = vstv %s1047
        %v1050 = vmul.f32 %v1049, %v917
        %v1051 = vadd.f32 %v1050, 0.0
        %v1052 = vstv %s1048
        %v1053 = vmul.f32 %v1052, %v928
        %v1054 = vadd.f32 %v1051, %v1053
        %s1055 = sld [smem:[#allocation4 + $0x8]]
        %s1056 = sld [smem:[#allocation4 + $0x39]]
        %v1057 = vstv %s1055
        %v1058 = vmul.f32 %v1057, %v917
        %1060 = vrot.lane.b32.xlu0 %v1058, 112
        %v1061 = vpop.permute.xlu0 %1060
        %v1062 = vrot.slane %v1061, 1
        %v1063 = vsel %vm924, %v1061, %v1062
        %v1065 = vadd.f32 %v1054, %v1063
        %v1066 = vstv %s1056
        %v1067 = vmul.f32 %v1066, %v928
        %1069 = vrot.lane.b32.xlu0 %v1067, 112
        %v1070 = vpop.permute.xlu0 %1069
        %v1071 = vrot.slane %v1070, 1
        %v1072 = vsel %vm924, %v1070, %v1071
        %v1074 = vadd.f32 %v1065, %v1072
        %s1075 = sld [smem:[#allocation4 + $0xf]]
        %s1076 = sld [smem:[#allocation4 + $0x40]]
        %v1077 = vstv %s1075
        %v1078 = vmul.f32 %v1077, %v917
        %1080 = vrot.lane.b32.xlu0 %v1078, 96
        %v1081 = vpop.permute.xlu0 %1080
        %v1082 = vrot.slane %v1081, 1
        %v1083 = vsel %vm946, %v1081, %v1082
        %v1085 = vadd.f32 %v1074, %v1083
        %v1086 = vstv %s1076
        %v1087 = vmul.f32 %v1086, %v928
        %1089 = vrot.lane.b32.xlu0 %v1087, 96
        %v1090 = vpop.permute.xlu0 %1089
        %v1091 = vrot.slane %v1090, 1
        %v1092 = vsel %vm946, %v1090, %v1091
        %v1094 = vadd.f32 %v1085, %v1092
        %s1095 = sld [smem:[#allocation4 + $0x16]]
        %s1096 = sld [smem:[#allocation4 + $0x47]]
        %v1097 = vstv %s1095
        %v1098 = vmul.f32 %v1097, %v917
        %1100 = vrot.lane.b32.xlu0 %v1098, 80
        %v1101 = vpop.permute.xlu0 %1100
        %v1102 = vrot.slane %v1101, 1
        %v1103 = vsel %vm967, %v1101, %v1102
        %v1105 = vadd.f32 %v1094, %v1103
        %v1106 = vstv %s1096
        %v1107 = vmul.f32 %v1106, %v928
        %1109 = vrot.lane.b32.xlu0 %v1107, 80
        %v1110 = vpop.permute.xlu0 %1109
        %v1111 = vrot.slane %v1110, 1
        %v1112 = vsel %vm967, %v1110, %v1111
        %v1114 = vadd.f32 %v1105, %v1112
        %s1115 = sld [smem:[#allocation4 + $0x1d]]
        %s1116 = sld [smem:[#allocation4 + $0x4e]]
        %v1117 = vstv %s1115
        %v1118 = vmul.f32 %v1117, %v917
        %1120 = vrot.lane.b32.xlu0 %v1118, 64
        %v1121 = vpop.permute.xlu0 %1120
        %v1122 = vrot.slane %v1121, 1
        %v1123 = vsel %vm988, %v1121, %v1122
        %v1125 = vadd.f32 %v1114, %v1123
        %v1126 = vstv %s1116
        %v1127 = vmul.f32 %v1126, %v928
        %1129 = vrot.lane.b32.xlu0 %v1127, 64
        %v1130 = vpop.permute.xlu0 %1129
        %v1131 = vrot.slane %v1130, 1
        %v1132 = vsel %vm988, %v1130, %v1131
        %v1134 = vadd.f32 %v1125, %v1132
        %s1135 = sld [smem:[#allocation4 + $0x24]]
        %s1136 = sld [smem:[#allocation4 + $0x55]]
        %v1137 = vstv %s1135
        %v1138 = vmul.f32 %v1137, %v917
        %1140 = vrot.lane.b32.xlu0 %v1138, 48
        %v1141 = vpop.permute.xlu0 %1140
        %v1142 = vrot.slane %v1141, 1
        %v1143 = vsel %vm1009, %v1141, %v1142
        %v1145 = vadd.f32 %v1134, %v1143
        %v1146 = vstv %s1136
        %v1147 = vmul.f32 %v1146, %v928
        %1149 = vrot.lane.b32.xlu0 %v1147, 48
        %v1150 = vpop.permute.xlu0 %1149
        %v1151 = vrot.slane %v1150, 1
        %v1152 = vsel %vm1009, %v1150, %v1151
        %v1154 = vadd.f32 %v1145, %v1152
        %s1155 = sld [smem:[#allocation4 + $0x2b]]
        %s1156 = sld [smem:[#allocation4 + $0x5c]]
        %v1157 = vstv %s1155
        %v1158 = vmul.f32 %v1157, %v917
        %1160 = vrot.lane.b32.xlu0 %v1158, 32
        %v1161 = vpop.permute.xlu0 %1160
        %v1162 = vrot.slane %v1161, 1
        %v1163 = vsel %vm1030, %v1161, %v1162
        %v1165 = vadd.f32 %v1154, %v1163
        %v1166 = vstv %s1156
        %v1167 = vmul.f32 %v1166, %v928
        %1169 = vrot.lane.b32.xlu0 %v1167, 32
        %v1170 = vpop.permute.xlu0 %1169
        %v1171 = vrot.slane %v1170, 1
        %v1172 = vsel %vm1030, %v1170, %v1171
        %v1174 = vadd.f32 %v1165, %v1172
        %1176 = vrot.lane.b32.xlu0 %v1174, 127
        %v1177 = vpop.permute.xlu0 %1176
        %v1178 = vrot.slane %v1177, 1
        %vm1179 = vcmask 1039360
        %v1180 = vsel %vm1179, %v1177, %v1178
        %v1182 = vmul.f32 %v1046, %v1180
        %v1183 = vadd.f32 %v1044, %v1182
        %s1184 = scalar_lea.vmem %s3, 2
        %v1185 = vld [vmem:[%s1184] ss:$8 sm:$0x3]
        %s1186 = sld [smem:[#allocation4 + $0x2]]
        %s1187 = sld [smem:[#allocation4 + $0x33]]
        %v1188 = vstv %s1186
        %v1189 = vmul.f32 %v1188, %v917
        %v1190 = vadd.f32 %v1189, 0.0
        %v1191 = vstv %s1187
        %v1192 = vmul.f32 %v1191, %v928
        %v1193 = vadd.f32 %v1190, %v1192
        %s1194 = sld [smem:[#allocation4 + $0x9]]
        %s1195 = sld [smem:[#allocation4 + $0x3a]]
        %v1196 = vstv %s1194
        %v1197 = vmul.f32 %v1196, %v917
        %1199 = vrot.lane.b32.xlu0 %v1197, 112
        %v1200 = vpop.permute.xlu0 %1199
        %v1201 = vrot.slane %v1200, 1
        %v1202 = vsel %vm924, %v1200, %v1201
        %v1204 = vadd.f32 %v1193, %v1202
        %v1205 = vstv %s1195
        %v1206 = vmul.f32 %v1205, %v928
        %1208 = vrot.lane.b32.xlu0 %v1206, 112
        %v1209 = vpop.permute.xlu0 %1208
        %v1210 = vrot.slane %v1209, 1
        %v1211 = vsel %vm924, %v1209, %v1210
        %v1213 = vadd.f32 %v1204, %v1211
        %s1214 = sld [smem:[#allocation4 + $0x10]]
        %s1215 = sld [smem:[#allocation4 + $0x41]]
        %v1216 = vstv %s1214
        %v1217 = vmul.f32 %v1216, %v917
        %1219 = vrot.lane.b32.xlu0 %v1217, 96
        %v1220 = vpop.permute.xlu0 %1219
        %v1221 = vrot.slane %v1220, 1
        %v1222 = vsel %vm946, %v1220, %v1221
        %v1224 = vadd.f32 %v1213, %v1222
        %v1225 = vstv %s1215
        %v1226 = vmul.f32 %v1225, %v928
        %1228 = vrot.lane.b32.xlu0 %v1226, 96
        %v1229 = vpop.permute.xlu0 %1228
        %v1230 = vrot.slane %v1229, 1
        %v1231 = vsel %vm946, %v1229, %v1230
        %v1233 = vadd.f32 %v1224, %v1231
        %s1234 = sld [smem:[#allocation4 + $0x17]]
        %s1235 = sld [smem:[#allocation4 + $0x48]]
        %v1236 = vstv %s1234
        %v1237 = vmul.f32 %v1236, %v917
        %1239 = vrot.lane.b32.xlu0 %v1237, 80
        %v1240 = vpop.permute.xlu0 %1239
        %v1241 = vrot.slane %v1240, 1
        %v1242 = vsel %vm967, %v1240, %v1241
        %v1244 = vadd.f32 %v1233, %v1242
        %v1245 = vstv %s1235
        %v1246 = vmul.f32 %v1245, %v928
        %1248 = vrot.lane.b32.xlu0 %v1246, 80
        %v1249 = vpop.permute.xlu0 %1248
        %v1250 = vrot.slane %v1249, 1
        %v1251 = vsel %vm967, %v1249, %v1250
        %v1253 = vadd.f32 %v1244, %v1251
        %s1254 = sld [smem:[#allocation4 + $0x1e]]
        %s1255 = sld [smem:[#allocation4 + $0x4f]]
        %v1256 = vstv %s1254
        %v1257 = vmul.f32 %v1256, %v917
        %1259 = vrot.lane.b32.xlu0 %v1257, 64
        %v1260 = vpop.permute.xlu0 %1259
        %v1261 = vrot.slane %v1260, 1
        %v1262 = vsel %vm988, %v1260, %v1261
        %v1264 = vadd.f32 %v1253, %v1262
        %v1265 = vstv %s1255
        %v1266 = vmul.f32 %v1265, %v928
        %1268 = vrot.lane.b32.xlu0 %v1266, 64
        %v1269 = vpop.permute.xlu0 %1268
        %v1270 = vrot.slane %v1269, 1
        %v1271 = vsel %vm988, %v1269, %v1270
        %v1273 = vadd.f32 %v1264, %v1271
        %s1274 = sld [smem:[#allocation4 + $0x25]]
        %s1275 = sld [smem:[#allocation4 + $0x56]]
        %v1276 = vstv %s1274
        %v1277 = vmul.f32 %v1276, %v917
        %1279 = vrot.lane.b32.xlu0 %v1277, 48
        %v1280 = vpop.permute.xlu0 %1279
        %v1281 = vrot.slane %v1280, 1
        %v1282 = vsel %vm1009, %v1280, %v1281
        %v1284 = vadd.f32 %v1273, %v1282
        %v1285 = vstv %s1275
        %v1286 = vmul.f32 %v1285, %v928
        %1288 = vrot.lane.b32.xlu0 %v1286, 48
        %v1289 = vpop.permute.xlu0 %1288
        %v1290 = vrot.slane %v1289, 1
        %v1291 = vsel %vm1009, %v1289, %v1290
        %v1293 = vadd.f32 %v1284, %v1291
        %s1294 = sld [smem:[#allocation4 + $0x2c]]
        %s1295 = sld [smem:[#allocation4 + $0x5d]]
        %v1296 = vstv %s1294
        %v1297 = vmul.f32 %v1296, %v917
        %1299 = vrot.lane.b32.xlu0 %v1297, 32
        %v1300 = vpop.permute.xlu0 %1299
        %v1301 = vrot.slane %v1300, 1
        %v1302 = vsel %vm1030, %v1300, %v1301
        %v1304 = vadd.f32 %v1293, %v1302
        %v1305 = vstv %s1295
        %v1306 = vmul.f32 %v1305, %v928
        %1308 = vrot.lane.b32.xlu0 %v1306, 32
        %v1309 = vpop.permute.xlu0 %1308
        %v1310 = vrot.slane %v1309, 1
        %v1311 = vsel %vm1030, %v1309, %v1310
        %v1313 = vadd.f32 %v1304, %v1311
        %1315 = vrot.lane.b32.xlu0 %v1313, 126
        %v1316 = vpop.permute.xlu0 %1315
        %v1317 = vrot.slane %v1316, 1
        %vm1318 = vcmask 1031168
        %v1319 = vsel %vm1318, %v1316, %v1317
        %v1321 = vmul.f32 %v1185, %v1319
        %v1322 = vadd.f32 %v1183, %v1321
        %s1323 = scalar_lea.vmem %s3, 3
        %v1324 = vld [vmem:[%s1323] ss:$8 sm:$0x3]
        %s1325 = sld [smem:[#allocation4 + $0x3]]
        %s1326 = sld [smem:[#allocation4 + $0x34]]
        %v1327 = vstv %s1325
        %v1328 = vmul.f32 %v1327, %v917
        %v1329 = vadd.f32 %v1328, 0.0
        %v1330 = vstv %s1326
        %v1331 = vmul.f32 %v1330, %v928
        %v1332 = vadd.f32 %v1329, %v1331
        %s1333 = sld [smem:[#allocation4 + $0xa]]
        %s1334 = sld [smem:[#allocation4 + $0x3b]]
        %v1335 = vstv %s1333
        %v1336 = vmul.f32 %v1335, %v917
        %1338 = vrot.lane.b32.xlu0 %v1336, 112
        %v1339 = vpop.permute.xlu0 %1338
        %v1340 = vrot.slane %v1339, 1
        %v1341 = vsel %vm924, %v1339, %v1340
        %v1343 = vadd.f32 %v1332, %v1341
        %v1344 = vstv %s1334
        %v1345 = vmul.f32 %v1344, %v928
        %1347 = vrot.lane.b32.xlu0 %v1345, 112
        %v1348 = vpop.permute.xlu0 %1347
        %v1349 = vrot.slane %v1348, 1
        %v1350 = vsel %vm924, %v1348, %v1349
        %v1352 = vadd.f32 %v1343, %v1350
        %s1353 = sld [smem:[#allocation4 + $0x11]]
        %s1354 = sld [smem:[#allocation4 + $0x42]]
        %v1355 = vstv %s1353
        %v1356 = vmul.f32 %v1355, %v917
        %1358 = vrot.lane.b32.xlu0 %v1356, 96
        %v1359 = vpop.permute.xlu0 %1358
        %v1360 = vrot.slane %v1359, 1
        %v1361 = vsel %vm946, %v1359, %v1360
        %v1363 = vadd.f32 %v1352, %v1361
        %v1364 = vstv %s1354
        %v1365 = vmul.f32 %v1364, %v928
        %1367 = vrot.lane.b32.xlu0 %v1365, 96
        %v1368 = vpop.permute.xlu0 %1367
        %v1369 = vrot.slane %v1368, 1
        %v1370 = vsel %vm946, %v1368, %v1369
        %v1372 = vadd.f32 %v1363, %v1370
        %s1373 = sld [smem:[#allocation4 + $0x18]]
        %s1374 = sld [smem:[#allocation4 + $0x49]]
        %v1375 = vstv %s1373
        %v1376 = vmul.f32 %v1375, %v917
        %1378 = vrot.lane.b32.xlu0 %v1376, 80
        %v1379 = vpop.permute.xlu0 %1378
        %v1380 = vrot.slane %v1379, 1
        %v1381 = vsel %vm967, %v1379, %v1380
        %v1383 = vadd.f32 %v1372, %v1381
        %v1384 = vstv %s1374
        %v1385 = vmul.f32 %v1384, %v928
        %1387 = vrot.lane.b32.xlu0 %v1385, 80
        %v1388 = vpop.permute.xlu0 %1387
        %v1389 = vrot.slane %v1388, 1
        %v1390 = vsel %vm967, %v1388, %v1389
        %v1392 = vadd.f32 %v1383, %v1390
        %s1393 = sld [smem:[#allocation4 + $0x1f]]
        %s1394 = sld [smem:[#allocation4 + $0x50]]
        %v1395 = vstv %s1393
        %v1396 = vmul.f32 %v1395, %v917
        %1398 = vrot.lane.b32.xlu0 %v1396, 64
        %v1399 = vpop.permute.xlu0 %1398
        %v1400 = vrot.slane %v1399, 1
        %v1401 = vsel %vm988, %v1399, %v1400
        %v1403 = vadd.f32 %v1392, %v1401
        %v1404 = vstv %s1394
        %v1405 = vmul.f32 %v1404, %v928
        %1407 = vrot.lane.b32.xlu0 %v1405, 64
        %v1408 = vpop.permute.xlu0 %1407
        %v1409 = vrot.slane %v1408, 1
        %v1410 = vsel %vm988, %v1408, %v1409
        %v1412 = vadd.f32 %v1403, %v1410
        %s1413 = sld [smem:[#allocation4 + $0x26]]
        %s1414 = sld [smem:[#allocation4 + $0x57]]
        %v1415 = vstv %s1413
        %v1416 = vmul.f32 %v1415, %v917
        %1418 = vrot.lane.b32.xlu0 %v1416, 48
        %v1419 = vpop.permute.xlu0 %1418
        %v1420 = vrot.slane %v1419, 1
        %v1421 = vsel %vm1009, %v1419, %v1420
        %v1423 = vadd.f32 %v1412, %v1421
        %v1424 = vstv %s1414
        %v1425 = vmul.f32 %v1424, %v928
        %1427 = vrot.lane.b32.xlu0 %v1425, 48
        %v1428 = vpop.permute.xlu0 %1427
        %v1429 = vrot.slane %v1428, 1
        %v1430 = vsel %vm1009, %v1428, %v1429
        %v1432 = vadd.f32 %v1423, %v1430
        %s1433 = sld [smem:[#allocation4 + $0x2d]]
        %s1434 = sld [smem:[#allocation4 + $0x5e]]
        %v1435 = vstv %s1433
        %v1436 = vmul.f32 %v1435, %v917
        %1438 = vrot.lane.b32.xlu0 %v1436, 32
        %v1439 = vpop.permute.xlu0 %1438
        %v1440 = vrot.slane %v1439, 1
        %v1441 = vsel %vm1030, %v1439, %v1440
        %v1443 = vadd.f32 %v1432, %v1441
        %v1444 = vstv %s1434
        %v1445 = vmul.f32 %v1444, %v928
        %1447 = vrot.lane.b32.xlu0 %v1445, 32
        %v1448 = vpop.permute.xlu0 %1447
        %v1449 = vrot.slane %v1448, 1
        %v1450 = vsel %vm1030, %v1448, %v1449
        %v1452 = vadd.f32 %v1443, %v1450
        %1454 = vrot.lane.b32.xlu0 %v1452, 125
        %v1455 = vpop.permute.xlu0 %1454
        %v1456 = vrot.slane %v1455, 1
        %vm1457 = vcmask 1022976
        %v1458 = vsel %vm1457, %v1455, %v1456
        %v1460 = vmul.f32 %v1324, %v1458
        %v1461 = vadd.f32 %v1322, %v1460
        %s1462 = scalar_lea.vmem %s3, 4
        %v1463 = vld [vmem:[%s1462] ss:$8 sm:$0x3]
        %s1464 = sld [smem:[#allocation4 + $0x4]]
        %s1465 = sld [smem:[#allocation4 + $0x35]]
        %v1466 = vstv %s1464
        %v1467 = vmul.f32 %v1466, %v917
        %v1468 = vadd.f32 %v1467, 0.0
        %v1469 = vstv %s1465
        %v1470 = vmul.f32 %v1469, %v928
        %v1471 = vadd.f32 %v1468, %v1470
        %s1472 = sld [smem:[#allocation4 + $0xb]]
        %s1473 = sld [smem:[#allocation4 + $0x3c]]
        %v1474 = vstv %s1472
        %v1475 = vmul.f32 %v1474, %v917
        %1477 = vrot.lane.b32.xlu0 %v1475, 112
        %v1478 = vpop.permute.xlu0 %1477
        %v1479 = vrot.slane %v1478, 1
        %v1480 = vsel %vm924, %v1478, %v1479
        %v1482 = vadd.f32 %v1471, %v1480
        %v1483 = vstv %s1473
        %v1484 = vmul.f32 %v1483, %v928
        %1486 = vrot.lane.b32.xlu0 %v1484, 112
        %v1487 = vpop.permute.xlu0 %1486
        %v1488 = vrot.slane %v1487, 1
        %v1489 = vsel %vm924, %v1487, %v1488
        %v1491 = vadd.f32 %v1482, %v1489
        %s1492 = sld [smem:[#allocation4 + $0x12]]
        %s1493 = sld [smem:[#allocation4 + $0x43]]
        %v1494 = vstv %s1492
        %v1495 = vmul.f32 %v1494, %v917
        %1497 = vrot.lane.b32.xlu0 %v1495, 96
        %v1498 = vpop.permute.xlu0 %1497
        %v1499 = vrot.slane %v1498, 1
        %v1500 = vsel %vm946, %v1498, %v1499
        %v1502 = vadd.f32 %v1491, %v1500
        %v1503 = vstv %s1493
        %v1504 = vmul.f32 %v1503, %v928
        %1506 = vrot.lane.b32.xlu0 %v1504, 96
        %v1507 = vpop.permute.xlu0 %1506
        %v1508 = vrot.slane %v1507, 1
        %v1509 = vsel %vm946, %v1507, %v1508
        %v1511 = vadd.f32 %v1502, %v1509
        %s1512 = sld [smem:[#allocation4 + $0x19]]
        %s1513 = sld [smem:[#allocation4 + $0x4a]]
        %v1514 = vstv %s1512
        %v1515 = vmul.f32 %v1514, %v917
        %1517 = vrot.lane.b32.xlu0 %v1515, 80
        %v1518 = vpop.permute.xlu0 %1517
        %v1519 = vrot.slane %v1518, 1
        %v1520 = vsel %vm967, %v1518, %v1519
        %v1522 = vadd.f32 %v1511, %v1520
        %v1523 = vstv %s1513
        %v1524 = vmul.f32 %v1523, %v928
        %1526 = vrot.lane.b32.xlu0 %v1524, 80
        %v1527 = vpop.permute.xlu0 %1526
        %v1528 = vrot.slane %v1527, 1
        %v1529 = vsel %vm967, %v1527, %v1528
        %v1531 = vadd.f32 %v1522, %v1529
        %s1532 = sld [smem:[#allocation4 + $0x20]]
        %s1533 = sld [smem:[#allocation4 + $0x51]]
        %v1534 = vstv %s1532
        %v1535 = vmul.f32 %v1534, %v917
        %1537 = vrot.lane.b32.xlu0 %v1535, 64
        %v1538 = vpop.permute.xlu0 %1537
        %v1539 = vrot.slane %v1538, 1
        %v1540 = vsel %vm988, %v1538, %v1539
        %v1542 = vadd.f32 %v1531, %v1540
        %v1543 = vstv %s1533
        %v1544 = vmul.f32 %v1543, %v928
        %1546 = vrot.lane.b32.xlu0 %v1544, 64
        %v1547 = vpop.permute.xlu0 %1546
        %v1548 = vrot.slane %v1547, 1
        %v1549 = vsel %vm988, %v1547, %v1548
        %v1551 = vadd.f32 %v1542, %v1549
        %s1552 = sld [smem:[#allocation4 + $0x27]]
        %s1553 = sld [smem:[#allocation4 + $0x58]]
        %v1554 = vstv %s1552
        %v1555 = vmul.f32 %v1554, %v917
        %1557 = vrot.lane.b32.xlu0 %v1555, 48
        %v1558 = vpop.permute.xlu0 %1557
        %v1559 = vrot.slane %v1558, 1
        %v1560 = vsel %vm1009, %v1558, %v1559
        %v1562 = vadd.f32 %v1551, %v1560
        %v1563 = vstv %s1553
        %v1564 = vmul.f32 %v1563, %v928
        %1566 = vrot.lane.b32.xlu0 %v1564, 48
        %v1567 = vpop.permute.xlu0 %1566
        %v1568 = vrot.slane %v1567, 1
        %v1569 = vsel %vm1009, %v1567, %v1568
        %v1571 = vadd.f32 %v1562, %v1569
        %s1572 = sld [smem:[#allocation4 + $0x2e]]
        %s1573 = sld [smem:[#allocation4 + $0x5f]]
        %v1574 = vstv %s1572
        %v1575 = vmul.f32 %v1574, %v917
        %1577 = vrot.lane.b32.xlu0 %v1575, 32
        %v1578 = vpop.permute.xlu0 %1577
        %v1579 = vrot.slane %v1578, 1
        %v1580 = vsel %vm1030, %v1578, %v1579
        %v1582 = vadd.f32 %v1571, %v1580
        %v1583 = vstv %s1573
        %v1584 = vmul.f32 %v1583, %v928
        %1586 = vrot.lane.b32.xlu0 %v1584, 32
        %v1587 = vpop.permute.xlu0 %1586
        %v1588 = vrot.slane %v1587, 1
        %v1589 = vsel %vm1030, %v1587, %v1588
        %v1591 = vadd.f32 %v1582, %v1589
        %1593 = vrot.lane.b32.xlu0 %v1591, 124
        %v1594 = vpop.permute.xlu0 %1593
        %v1595 = vrot.slane %v1594, 1
        %vm1596 = vcmask 1014784
        %v1597 = vsel %vm1596, %v1594, %v1595
        %v1599 = vmul.f32 %v1463, %v1597
        %v1600 = vadd.f32 %v1461, %v1599
        %s1601 = scalar_lea.vmem %s3, 5
        %v1602 = vld [vmem:[%s1601] ss:$8 sm:$0x3]
        %s1603 = sld [smem:[#allocation4 + $0x5]]
        %s1604 = sld [smem:[#allocation4 + $0x36]]
        %v1605 = vstv %s1603
        %v1606 = vmul.f32 %v1605, %v917
        %v1607 = vadd.f32 %v1606, 0.0
        %v1608 = vstv %s1604
        %v1609 = vmul.f32 %v1608, %v928
        %v1610 = vadd.f32 %v1607, %v1609
        %s1611 = sld [smem:[#allocation4 + $0xc]]
        %s1612 = sld [smem:[#allocation4 + $0x3d]]
        %v1613 = vstv %s1611
        %v1614 = vmul.f32 %v1613, %v917
        %1616 = vrot.lane.b32.xlu0 %v1614, 112
        %v1617 = vpop.permute.xlu0 %1616
        %v1618 = vrot.slane %v1617, 1
        %v1619 = vsel %vm924, %v1617, %v1618
        %v1621 = vadd.f32 %v1610, %v1619
        %v1622 = vstv %s1612
        %v1623 = vmul.f32 %v1622, %v928
        %1625 = vrot.lane.b32.xlu0 %v1623, 112
        %v1626 = vpop.permute.xlu0 %1625
        %v1627 = vrot.slane %v1626, 1
        %v1628 = vsel %vm924, %v1626, %v1627
        %v1630 = vadd.f32 %v1621, %v1628
        %s1631 = sld [smem:[#allocation4 + $0x13]]
        %s1632 = sld [smem:[#allocation4 + $0x44]]
        %v1633 = vstv %s1631
        %v1634 = vmul.f32 %v1633, %v917
        %1636 = vrot.lane.b32.xlu0 %v1634, 96
        %v1637 = vpop.permute.xlu0 %1636
        %v1638 = vrot.slane %v1637, 1
        %v1639 = vsel %vm946, %v1637, %v1638
        %v1641 = vadd.f32 %v1630, %v1639
        %v1642 = vstv %s1632
        %v1643 = vmul.f32 %v1642, %v928
        %1645 = vrot.lane.b32.xlu0 %v1643, 96
        %v1646 = vpop.permute.xlu0 %1645
        %v1647 = vrot.slane %v1646, 1
        %v1648 = vsel %vm946, %v1646, %v1647
        %v1650 = vadd.f32 %v1641, %v1648
        %s1651 = sld [smem:[#allocation4 + $0x1a]]
        %s1652 = sld [smem:[#allocation4 + $0x4b]]
        %v1653 = vstv %s1651
        %v1654 = vmul.f32 %v1653, %v917
        %1656 = vrot.lane.b32.xlu0 %v1654, 80
        %v1657 = vpop.permute.xlu0 %1656
        %v1658 = vrot.slane %v1657, 1
        %v1659 = vsel %vm967, %v1657, %v1658
        %v1661 = vadd.f32 %v1650, %v1659
        %v1662 = vstv %s1652
        %v1663 = vmul.f32 %v1662, %v928
        %1665 = vrot.lane.b32.xlu0 %v1663, 80
        %v1666 = vpop.permute.xlu0 %1665
        %v1667 = vrot.slane %v1666, 1
        %v1668 = vsel %vm967, %v1666, %v1667
        %v1670 = vadd.f32 %v1661, %v1668
        %s1671 = sld [smem:[#allocation4 + $0x21]]
        %s1672 = sld [smem:[#allocation4 + $0x52]]
        %v1673 = vstv %s1671
        %v1674 = vmul.f32 %v1673, %v917
        %1676 = vrot.lane.b32.xlu0 %v1674, 64
        %v1677 = vpop.permute.xlu0 %1676
        %v1678 = vrot.slane %v1677, 1
        %v1679 = vsel %vm988, %v1677, %v1678
        %v1681 = vadd.f32 %v1670, %v1679
        %v1682 = vstv %s1672
        %v1683 = vmul.f32 %v1682, %v928
        %1685 = vrot.lane.b32.xlu0 %v1683, 64
        %v1686 = vpop.permute.xlu0 %1685
        %v1687 = vrot.slane %v1686, 1
        %v1688 = vsel %vm988, %v1686, %v1687
        %v1690 = vadd.f32 %v1681, %v1688
        %s1691 = sld [smem:[#allocation4 + $0x28]]
        %s1692 = sld [smem:[#allocation4 + $0x59]]
        %v1693 = vstv %s1691
        %v1694 = vmul.f32 %v1693, %v917
        %1696 = vrot.lane.b32.xlu0 %v1694, 48
        %v1697 = vpop.permute.xlu0 %1696
        %v1698 = vrot.slane %v1697, 1
        %v1699 = vsel %vm1009, %v1697, %v1698
        %v1701 = vadd.f32 %v1690, %v1699
        %v1702 = vstv %s1692
        %v1703 = vmul.f32 %v1702, %v928
        %1705 = vrot.lane.b32.xlu0 %v1703, 48
        %v1706 = vpop.permute.xlu0 %1705
        %v1707 = vrot.slane %v1706, 1
        %v1708 = vsel %vm1009, %v1706, %v1707
        %v1710 = vadd.f32 %v1701, %v1708
        %s1711 = sld [smem:[#allocation4 + $0x2f]]
        %s1712 = sld [smem:[#allocation4 + $0x60]]
        %v1713 = vstv %s1711
        %v1714 = vmul.f32 %v1713, %v917
        %1716 = vrot.lane.b32.xlu0 %v1714, 32
        %v1717 = vpop.permute.xlu0 %1716
        %v1718 = vrot.slane %v1717, 1
        %v1719 = vsel %vm1030, %v1717, %v1718
        %v1721 = vadd.f32 %v1710, %v1719
        %v1722 = vstv %s1712
        %v1723 = vmul.f32 %v1722, %v928
        %1725 = vrot.lane.b32.xlu0 %v1723, 32
        %v1726 = vpop.permute.xlu0 %1725
        %v1727 = vrot.slane %v1726, 1
        %v1728 = vsel %vm1030, %v1726, %v1727
        %v1730 = vadd.f32 %v1721, %v1728
        %1732 = vrot.lane.b32.xlu0 %v1730, 123
        %v1733 = vpop.permute.xlu0 %1732
        %v1734 = vrot.slane %v1733, 1
        %vm1735 = vcmask 1006592
        %v1736 = vsel %vm1735, %v1733, %v1734
        %v1738 = vmul.f32 %v1602, %v1736
        %v1739 = vadd.f32 %v1600, %v1738
        %s1740 = scalar_lea.vmem %s3, 6
        %v1741 = vld [vmem:[%s1740] ss:$8 sm:$0x3]
        %s1742 = sld [smem:[#allocation4 + $0x6]]
        %s1743 = sld [smem:[#allocation4 + $0x37]]
        %v1744 = vstv %s1742
        %v1745 = vmul.f32 %v1744, %v917
        %v1746 = vadd.f32 %v1745, 0.0
        %v1747 = vstv %s1743
        %v1748 = vmul.f32 %v1747, %v928
        %v1749 = vadd.f32 %v1746, %v1748
        %s1750 = sld [smem:[#allocation4 + $0xd]]
        %s1751 = sld [smem:[#allocation4 + $0x3e]]
        %v1752 = vstv %s1750
        %v1753 = vmul.f32 %v1752, %v917
        %1755 = vrot.lane.b32.xlu0 %v1753, 112
        %v1756 = vpop.permute.xlu0 %1755
        %v1757 = vrot.slane %v1756, 1
        %v1758 = vsel %vm924, %v1756, %v1757
        %v1760 = vadd.f32 %v1749, %v1758
        %v1761 = vstv %s1751
        %v1762 = vmul.f32 %v1761, %v928
        %1764 = vrot.lane.b32.xlu0 %v1762, 112
        %v1765 = vpop.permute.xlu0 %1764
        %v1766 = vrot.slane %v1765, 1
        %v1767 = vsel %vm924, %v1765, %v1766
        %v1769 = vadd.f32 %v1760, %v1767
        %s1770 = sld [smem:[#allocation4 + $0x14]]
        %s1771 = sld [smem:[#allocation4 + $0x45]]
        %v1772 = vstv %s1770
        %v1773 = vmul.f32 %v1772, %v917
        %1775 = vrot.lane.b32.xlu0 %v1773, 96
        %v1776 = vpop.permute.xlu0 %1775
        %v1777 = vrot.slane %v1776, 1
        %v1778 = vsel %vm946, %v1776, %v1777
        %v1780 = vadd.f32 %v1769, %v1778
        %v1781 = vstv %s1771
        %v1782 = vmul.f32 %v1781, %v928
        %1784 = vrot.lane.b32.xlu0 %v1782, 96
        %v1785 = vpop.permute.xlu0 %1784
        %v1786 = vrot.slane %v1785, 1
        %v1787 = vsel %vm946, %v1785, %v1786
        %v1789 = vadd.f32 %v1780, %v1787
        %s1790 = sld [smem:[#allocation4 + $0x1b]]
        %s1791 = sld [smem:[#allocation4 + $0x4c]]
        %v1792 = vstv %s1790
        %v1793 = vmul.f32 %v1792, %v917
        %1795 = vrot.lane.b32.xlu0 %v1793, 80
        %v1796 = vpop.permute.xlu0 %1795
        %v1797 = vrot.slane %v1796, 1
        %v1798 = vsel %vm967, %v1796, %v1797
        %v1800 = vadd.f32 %v1789, %v1798
        %v1801 = vstv %s1791
        %v1802 = vmul.f32 %v1801, %v928
        %1804 = vrot.lane.b32.xlu0 %v1802, 80
        %v1805 = vpop.permute.xlu0 %1804
        %v1806 = vrot.slane %v1805, 1
        %v1807 = vsel %vm967, %v1805, %v1806
        %v1809 = vadd.f32 %v1800, %v1807
        %s1810 = sld [smem:[#allocation4 + $0x22]]
        %s1811 = sld [smem:[#allocation4 + $0x53]]
        %v1812 = vstv %s1810
        %v1813 = vmul.f32 %v1812, %v917
        %1815 = vrot.lane.b32.xlu0 %v1813, 64
        %v1816 = vpop.permute.xlu0 %1815
        %v1817 = vrot.slane %v1816, 1
        %v1818 = vsel %vm988, %v1816, %v1817
        %v1820 = vadd.f32 %v1809, %v1818
        %v1821 = vstv %s1811
        %v1822 = vmul.f32 %v1821, %v928
        %1824 = vrot.lane.b32.xlu0 %v1822, 64
        %v1825 = vpop.permute.xlu0 %1824
        %v1826 = vrot.slane %v1825, 1
        %v1827 = vsel %vm988, %v1825, %v1826
        %v1829 = vadd.f32 %v1820, %v1827
        %s1830 = sld [smem:[#allocation4 + $0x29]]
        %s1831 = sld [smem:[#allocation4 + $0x5a]]
        %v1832 = vstv %s1830
        %v1833 = vmul.f32 %v1832, %v917
        %1835 = vrot.lane.b32.xlu0 %v1833, 48
        %v1836 = vpop.permute.xlu0 %1835
        %v1837 = vrot.slane %v1836, 1
        %v1838 = vsel %vm1009, %v1836, %v1837
        %v1840 = vadd.f32 %v1829, %v1838
        %v1841 = vstv %s1831
        %v1842 = vmul.f32 %v1841, %v928
        %1844 = vrot.lane.b32.xlu0 %v1842, 48
        %v1845 = vpop.permute.xlu0 %1844
        %v1846 = vrot.slane %v1845, 1
        %v1847 = vsel %vm1009, %v1845, %v1846
        %v1849 = vadd.f32 %v1840, %v1847
        %s1850 = sld [smem:[#allocation4 + $0x30]]
        %s1851 = sld [smem:[#allocation4 + $0x61]]
        %v1852 = vstv %s1850
        %v1853 = vmul.f32 %v1852, %v917
        %1855 = vrot.lane.b32.xlu0 %v1853, 32
        %v1856 = vpop.permute.xlu0 %1855
        %v1857 = vrot.slane %v1856, 1
        %v1858 = vsel %vm1030, %v1856, %v1857
        %v1860 = vadd.f32 %v1849, %v1858
        %v1861 = vstv %s1851
        %v1862 = vmul.f32 %v1861, %v928
        %1864 = vrot.lane.b32.xlu0 %v1862, 32
        %v1865 = vpop.permute.xlu0 %1864
        %v1866 = vrot.slane %v1865, 1
        %v1867 = vsel %vm1030, %v1865, %v1866
        %v1869 = vadd.f32 %v1860, %v1867
        %1871 = vrot.lane.b32.xlu0 %v1869, 122
        %v1872 = vpop.permute.xlu0 %1871
        %v1873 = vrot.slane %v1872, 1
        %vm1874 = vcmask 998400
        %v1875 = vsel %vm1874, %v1872, %v1873
        %v1877 = vmul.f32 %v1741, %v1875
        %v1878 = vadd.f32 %v1739, %v1877
        %v1879 = vsub.f32 0.0, %v1878
        %v1880 = vmul.f32 %v1879, 1.442695
        %v1881 = vpow.pop %v1880
        %v1882 = vadd.f32 %v1881, 1.0
        %v1883 = vrcp.pop %v1882
        %v1884 = vmul.f32 1.0, %v1883
        %v1886 = vlaneseq
        %v1887 = vshrl.u32 %v1886, 7
        %v1888 = vsub.s32 0, %v1887
        %v1889 = vrot.slane %v1884, %v1888
        %v1890 = vlaneseq
        %v1891 = vshrl.u32 %v1890, 7
        %v1892 = vsub.s32 1, %v1891
        %v1893 = vrot.slane %v1884, %v1892
        %v1896 = vmul.f32 %v813, %v1889
        %v1897 = vmul.f32 %v814, %v1893
        %v1898 = vmul.f32 %v815, %v1889
        %v1899 = vmul.f32 %v816, %v1893
        %1900 = vst [vmem:[%s231] sm:$0xff] %v1896
        %1901 = vst [vmem:[%s231 + $0x8] sm:$0xff] %v1897
        %1902 = vst [vmem:[%s231 + $0x10] sm:$0xff] %v1898
        %1903 = vst [vmem:[%s231 + $0x18] sm:$0xff] %v1899
        %s1904 = sand.u32 %s138, 1
        %s1905 = scalar_lea.sflag [#allocation5], %s1904
        %s1906 = sand.u32 %s138, 1
        %s1907 = smul.addr %s1906, 32
        %s1908 = scalar_lea.vmem [#allocation7], %s1907
        // Predicated region
        $region45: #{tpu_custom_call.1} parent=39 // pred_check
          %p1909 = pneg %p148
        $region46: #{tpu_custom_call.1} parent=39 // pred_check_branch
          %1911 = sbr.rel (%p1909) target = $region48
        $region47: #{tpu_custom_call.1} parent=39 // pred_region
          %s1913 = ssub.s32 512, 512
          %1914 = vsyncadd %s1905, %s1913
          %s1915 = smul.addr %s20, 4
          %s1916 = smul.addr %s1915, 128
          %s1917 = scalar_lea.hbm %s5, %s1916
          %s1918 = sshll.u32 %s1908, 4
          %s1919 = int_to_ptr.vmem [resolvable:$true] %s1918
          %1924 = dma.vmem_to_hbm [thread:$0]  %s1919, 512, %s1917, %s1905, 256, 256, 16
        $region48: #{tpu_custom_call.1} parent=39 // pred_fallthru
          _
      $region40: #{tpu_custom_call.1} parent=5 // pred_fallthru
        _
      %p1925 = scmp.le.s32.totalorder 2, %s15
      // Predicated region
      $region49: #{tpu_custom_call.1} parent=5 // pred_check
        %p1926 = pneg %p1925
      $region50: #{tpu_custom_call.1} parent=5 // pred_check_branch
        %1928 = sbr.rel (%p1926) target = $region52
      $region51: #{tpu_custom_call.1} parent=5 // pred_region
        %s1929 = ssub.s32 %s15, 2
        // Predicated region
        $region53: #{tpu_custom_call.1} parent=51 // pred_check
          %p1930 = pneg %p154
        $region54: #{tpu_custom_call.1} parent=51 // pred_check_branch
          %1932 = sbr.rel (%p1930) target = $region56
        $region55: #{tpu_custom_call.1} parent=51 // pred_region
          %s1933 = sand.u32 %s139, 1
          %s1934 = scalar_lea.sflag [#allocation5], %s1933
          %s1935 = sand.u32 %s139, 1
          %s1936 = smul.addr %s1935, 32
          %s1937 = scalar_lea.vmem [#allocation7], %s1936
          %1938 = dma.done %s1934, 512
        $region56: #{tpu_custom_call.1} parent=51 // pred_fallthru
          _
      $region52: #{tpu_custom_call.1} parent=5 // pred_fallthru
        _
    $region6: #{tpu_custom_call.1} parent=1 // loop_footer
      %s19 = sadd.s32 1, %s15
    $region7: #{tpu_custom_call.1} parent=1 // loop_footer_branch
      %14 = sbr.rel target = $region3
    $region8: #{tpu_custom_call.1} parent=1 // loop_exit
      _
    %1939 = vsyncpa [#allocation5], 1
    %s1940 = scalar_lea.sflag [#allocation5], 1
    %1941 = vsyncpa %s1940, 1
    %1942 = vsyncpa [#allocation6], 1
    %s1943 = scalar_lea.sflag [#allocation6], 1
    %1944 = vsyncpa %s1943, 1

</llo_original>
